<compile_context>
chip_gen: v7x
topology: tpu7x:2x2x1
jax: 0.10.0
libtpu: 0.0.40
codegen_flags: <defaults>
</compile_context>

<pallas_src>
import functools
import math

import jax
import jax.numpy as jnp
from jax.experimental import pallas as pl
from jax.experimental.pallas import tpu as pltpu

_NUM_CANDIDATES = 128   # lane width of the carried top-k scratch (slots >= k unused)
_MAX_K = 32             # practical ceiling for the unrolled extraction / merge code


def _round_up(n, m):
    return ((n + m - 1) // m) * m


def _cdiv(a, b):
    return (a + b - 1) // b


def _knn_kernel(x_ref, mem_ref, lab_ref, bias_ref, out_ref,
                xn_ref, cand_val_ref, cand_lab_ref,
                *, k, inv_temperature, num_classes, approx_recip):
    # x_ref:   (TB, D) f32              mem_ref:  (D, TQ) compute dtype (transposed queue)
    # lab_ref: (1, TQ) int32            bias_ref: (1, TQ) f32 (0 valid / -inf padding)
    # out_ref: (TB, Cpad) f32
    # xn_ref:  (TB, D) compute-dtype scratch (normalized queries)
    # cand_*:  (TB, 128) f32 / int32 scratch (carried top-k values / labels, sorted desc)
    qi = pl.program_id(1)
    nq = pl.num_programs(1)
    tb = x_ref.shape[0]
    tq = mem_ref.shape[1]
    neg_inf = jnp.float32(-jnp.inf)
    lab_bits = max(1, (num_classes - 1).bit_length())
    lab_mask = (1 << lab_bits) - 1

    # ---- once per batch tile: L2-normalize x (F.normalize) and reset the
    #      carried top-k buffers ---------------------------------------------
    @pl.when(qi == 0)
    def _init():
        x = x_ref[...]
        sq = jnp.sum(x * x, axis=1, keepdims=True)
        xn = x * jax.lax.rsqrt(jnp.maximum(sq, jnp.float32(1e-24)))     # EUP rsqrt
        xn_ref[...] = xn.astype(xn_ref.dtype)
        cand_val_ref[...] = jnp.full_like(cand_val_ref, neg_inf)
        cand_lab_ref[...] = jnp.zeros_like(cand_lab_ref)

    # ---- partial similarities: plain (TB,D)x(D,TQ) matmul, f32 accumulation -
    dist = jnp.dot(xn_ref[...], mem_ref[...],
                   preferred_element_type=jnp.float32)                  # (TB, TQ)
    dist = dist + bias_ref[...]            # (1, TQ) broadcast; queue padding -> -inf

    # Row-invariant helpers stay (1, TQ) and broadcast inside compare/select.
    pos_row = jax.lax.broadcasted_iota(jnp.int32, (1, tq), 1)
    packed_row = (pos_row << lab_bits) | lab_ref[...]    # position|label in one i32
    big = jnp.int32(tq << lab_bits)                      # > any packed key

    # Carried candidates are sorted descending; read the k used columns once.
    cand_v = [cand_val_ref[:, t:t + 1] for t in range(k)]
    cand_l = [cand_lab_ref[:, t:t + 1] for t in range(k)]

    def pick(cols, ptr, upto):
        # ptr in [0, upto], upto < k; tiny (TB,1)-wide select chain (no XLU).
        out = cols[0]
        for t in range(1, upto + 1):
            out = jnp.where(ptr == t, cols[t], out)
        return out

    # ---- k max-extractions merging the dist tile with the carried top-k ----
    ptr = jnp.zeros((tb, 1), jnp.int32)
    top_vals, top_labs = [], []
    for t in range(k):
        m_d = jnp.max(dist, axis=1, keepdims=True)                      # XLU reduce
        win = jnp.min(jnp.where(dist == m_d, packed_row, big),
                      axis=1, keepdims=True)                            # XLU reduce
        d_lab = win & lab_mask
        v_c = pick(cand_v, ptr, t)
        l_c = pick(cand_l, ptr, t)
        # Candidates come from earlier tiles (lower original indices): ties
        # prefer the candidate, matching top_k's lowest-index tie-break.
        cand_wins = v_c >= m_d
        top_vals.append(jnp.maximum(v_c, m_d))
        top_labs.append(jnp.where(cand_wins, l_c, d_lab))
        if t + 1 < k:
            ptr = ptr + cand_wins.astype(jnp.int32)
            kill = jnp.where(cand_wins, jnp.int32(-1), win >> lab_bits)
            dist = jnp.where(pos_row == kill, neg_inf, dist)

    # ---- carry the k winners to the next queue tile (narrow column stores) --
    @pl.when(qi != nq - 1)
    def _carry():
        for t in range(k):
            cand_val_ref[:, t:t + 1] = top_vals[t]
            cand_lab_ref[:, t:t + 1] = top_labs[t]

    # ---- last queue tile: softmax over the k winners + one-hot class vote ---
    # NOTE: for very large class counts (Cpad >> 128) consider chunking the
    # vote over 128-lane class groups to avoid re-introducing spills here.
    @pl.when(qi == nq - 1)
    def _finalize():
        c_pad = out_ref.shape[1]
        cls_row = jax.lax.broadcasted_iota(jnp.int32, (1, c_pad), 1)
        # Extraction is in descending order -> top_vals[0] is the row max and
        # its softmax weight is exp(0) == 1 (first iteration peeled).
        m0 = top_vals[0]
        acc = (cls_row == top_labs[0]).astype(jnp.float32)
        lsum = jnp.ones((tb, 1), jnp.float32)
        for t in range(1, k):
            w = jnp.exp((top_vals[t] - m0) * jnp.float32(inv_temperature))
            lsum = lsum + w
            acc = acc + w * (cls_row == top_labs[t]).astype(jnp.float32)
        pred = acc * pl.reciprocal(lsum, approx=approx_recip)           # EUP recip
        out_ref[...] = jnp.minimum(pred + jnp.float32(1e-5), jnp.float32(1.0))


def prepare_queue(memory, memory_label, *, compute_dtype=jnp.bfloat16, block_q=512):
    """One-time (update_queue-time) preparation of the queue buffers.

    Casts the queue to the MXU compute dtype, stores it transposed as (D, Q)
    so the kernel's matmul is a plain NN contraction, pads Q to a multiple of
    block_q, and precomputes the (1, Q) padding-bias row.  Doing this once per
    queue update (instead of per forward call) removes a full Q x D HBM
    read+write from every forward pass.
    """
    q, d = memory.shape
    block_q = max(128, _round_up(int(block_q), 128))
    q_pad = _round_up(q, block_q)
    mem_t = jnp.zeros((d, q_pad), compute_dtype)
    mem_t = mem_t.at[:, :q].set(memory.T.astype(compute_dtype))
    labels = jnp.zeros((1, q_pad), jnp.int32)
    labels = labels.at[:, :q].set(memory_label.astype(jnp.int32)[None, :])
    bias = jnp.full((1, q_pad), -jnp.inf, jnp.float32)
    bias = bias.at[:, :q].set(0.0)
    return {"mem_t": mem_t, "labels": labels, "bias": bias,
            "valid_q": q, "block_q": block_q, "compute_dtype": compute_dtype}


def momentum_queue_forward(x, prepared, *, temperature, k, classes,
                           block_b=None, approx_recip=True):
    """x: (B, D) f32, prepared: output of prepare_queue -> (B, classes) f32."""
    mem_t, labels, bias = prepared["mem_t"], prepared["labels"], prepared["bias"]
    valid_q, block_q = prepared["valid_q"], prepared["block_q"]
    compute_dtype = prepared["compute_dtype"]

    b, d = x.shape
    d2, q_pad = mem_t.shape
    assert d == d2
    assert 1 <= k <= valid_q, "k must be in [1, queue_size]"
    assert k <= _MAX_K and k <= _NUM_CANDIDATES, "k too large for the unrolled merge"
    lab_bits = max(1, (classes - 1).bit_length())
    assert (block_q << lab_bits) < 2 ** 31, "packed (position|label) key overflows int32"

    # Batch tile: multiple of 8, capped at 32 rows (keeps the merge loop's live
    # set inside the vreg file), and >=2 tiles whenever b >= 16 so the parallel
    # grid axis can be sharded across v7x's two TensorCores.
    if block_b is None:
        block_b = _round_up(_cdiv(b, 2), 8) if b >= 16 else _round_up(b, 8)
        block_b = min(32, block_b)
    block_b = max(8, _round_up(int(block_b), 8))
    b_pad = _round_up(b, block_b)

    c_pad = _round_up(classes, 128)          # lane-dense output stores

    x_p = x.astype(jnp.float32)
    if b_pad != b:
        x_p = jnp.pad(x_p, ((0, b_pad - b), (0, 0)))

    kernel = functools.partial(
        _knn_kernel, k=k, inv_temperature=1.0 / temperature, num_classes=classes,
        approx_recip=approx_recip)

    mem_item = jnp.dtype(compute_dtype).itemsize
    vmem_est = (2 * d * block_q * mem_item          # queue tiles (double-buffered)
                + 2 * 2 * block_q * 4               # labels + bias tiles
                + 2 * block_b * d * 4               # x tile
                + 2 * block_b * c_pad * 4           # output tile
                + block_b * d * mem_item            # xn scratch
                + block_b * _NUM_CANDIDATES * 8)    # candidate scratch
    vmem_limit = int(min(max(4 * vmem_est, 24 << 20), 60 << 20))

    cost = pl.CostEstimate(
        flops=2 * b_pad * q_pad * d,
        transcendentals=b_pad * (k + 2),
        bytes_accessed=q_pad * d * mem_item + q_pad * 8 + b_pad * d * 4
                       + b_pad * c_pad * 4)

    out = pl.pallas_call(
        kernel,
        out_shape=jax.ShapeDtypeStruct((b_pad, c_pad), jnp.float32),
        grid_spec=pltpu.PrefetchScalarGridSpec(
            num_scalar_prefetch=0,
            grid=(b_pad // block_b, q_pad // block_q),      # reduction (Q) axis last
            in_specs=[
                pl.BlockSpec((block_b, d), lambda i, j: (i, 0)),   # x (invariant in j)
                pl.BlockSpec((d, block_q), lambda i, j: (0, j)),   # queue tile (D, TQ)
                pl.BlockSpec((1, block_q), lambda i, j: (0, j)),   # labels tile
                pl.BlockSpec((1, block_q), lambda i, j: (0, j)),   # padding bias tile
            ],
            out_specs=pl.BlockSpec((block_b, c_pad), lambda i, j: (i, 0)),
            scratch_shapes=[
                pltpu.VMEM((block_b, d), compute_dtype),              # normalized x
                pltpu.VMEM((block_b, _NUM_CANDIDATES), jnp.float32),  # carried top-k vals
                pltpu.VMEM((block_b, _NUM_CANDIDATES), jnp.int32),    # carried top-k labels
            ]),
        compiler_params=pltpu.CompilerParams(
            dimension_semantics=("parallel", "arbitrary"),
            vmem_limit_bytes=vmem_limit),
        cost_estimate=cost,
    )(x_p, mem_t, labels, bias)

    return out[:b, :classes]


def _reference(x, memory, memory_label, *, temperature, k, classes,
               matmul_dtype=jnp.float32):
    xn = x / jnp.maximum(jnp.linalg.norm(x, axis=1, keepdims=True), 1e-12)
    xn = xn.astype(matmul_dtype).astype(jnp.float32)
    mem = memory.astype(matmul_dtype).astype(jnp.float32)
    dist = xn @ mem.T
    vals, idxs = jax.lax.top_k(dist, k)
    labs = memory_label[idxs]
    w = jax.nn.softmax(vals / temperature, axis=1)
    onehot = jax.nn.one_hot(labs, classes, dtype=jnp.float32)
    pred = jnp.sum(onehot * w[..., None], axis=1)
    return jnp.minimum(pred + 1e-5, 1.0)


if __name__ == "__main__":
    # Small shapes consistent with the module.  queue_size / batch chosen to
    # exercise Q streaming (3 tiles), queue padding, batch padding and >=2
    # batch tiles on the parallel axis.
    feature_dim = 32
    queue_size = 300
    classes = 8
    k = 5
    temperature = 0.07
    batch = 24

    key = jax.random.PRNGKey(0)
    kx, kmem, klab = jax.random.split(key, 3)

    x = jax.random.normal(kx, (batch, feature_dim), dtype=jnp.float32)

    # memory init exactly as the module's __init__: uniform * 2*stdv - stdv
    stdv = 1.0 / math.sqrt(feature_dim / 3)
    memory = jax.random.uniform(kmem, (queue_size, feature_dim),
                                dtype=jnp.float32) * (2 * stdv) - stdv
    # __init__ sets memory_label = zeros; use deterministic random labels here
    # (as update_queue would populate them) so the class-vote path is exercised.
    memory_label = jax.random.randint(klab, (queue_size,), 0, classes,
                                      dtype=jnp.int32)

    ref_f32 = _reference(x, memory, memory_label, temperature=temperature,
                         k=k, classes=classes, matmul_dtype=jnp.float32)
    ref_bf16 = _reference(x, memory, memory_label, temperature=temperature,
                          k=k, classes=classes, matmul_dtype=jnp.bfloat16)

    # 1) f32 queue, streamed in 3 tiles of 128, 2 batch tiles -> strict-ish check.
    prep_f32 = prepare_queue(memory, memory_label,
                             compute_dtype=jnp.float32, block_q=128)
    pred_f32 = momentum_queue_forward(x, prep_f32, temperature=temperature,
                                      k=k, classes=classes)
    pred_f32 = jax.block_until_ready(pred_f32)
    assert pred_f32.shape == (batch, classes)
    assert jnp.allclose(pred_f32, ref_f32, atol=5e-3, rtol=5e-3), (pred_f32, ref_f32)

    # 2) bf16 queue (production setting), streamed; prepared once, reused.
    prep_bf16 = prepare_queue(memory, memory_label,
                              compute_dtype=jnp.bfloat16, block_q=128)
    pred_bf16 = momentum_queue_forward(x, prep_bf16, temperature=temperature,
                                       k=k, classes=classes)
    pred_bf16 = jax.block_until_ready(pred_bf16)
    assert jnp.allclose(pred_bf16, ref_bf16, atol=1e-2, rtol=1e-2), (pred_bf16, ref_bf16)

    # 3) bf16 queue, single queue tile, smaller batch tile (3 parallel steps).
    prep_one = prepare_queue(memory, memory_label,
                             compute_dtype=jnp.bfloat16, block_q=512)
    pred_one = momentum_queue_forward(x, prep_one, temperature=temperature,
                                      k=k, classes=classes, block_b=8)
    pred_one = jax.block_until_ready(pred_one)
    assert jnp.allclose(pred_one, ref_bf16, atol=1e-2, rtol=1e-2), (pred_one, ref_bf16)

    print("KERNEL_OK")
</pallas_src>

<mosaic_0001>
module attributes {stable_mosaic.version = 11 : i64} {
  func.func @_knn_kernel(%arg0: i32, %arg1: i32, %arg2: memref<16x32xf32, #tpu.memory_space<vmem>>, %arg3: memref<32x128xf32, #tpu.memory_space<vmem>>, %arg4: memref<1x128xi32, #tpu.memory_space<vmem>>, %arg5: memref<1x128xf32, #tpu.memory_space<vmem>>, %arg6: memref<16x128xf32, #tpu.memory_space<vmem>>, %arg7: memref<16x32xf32, #tpu.memory_space<vmem>>, %arg8: memref<16x128xf32, #tpu.memory_space<vmem>>, %arg9: memref<16x128xi32, #tpu.memory_space<vmem>>) attributes {dimension_semantics = [#tpu.dimension_semantics<parallel>, #tpu.dimension_semantics<arbitrary>], iteration_bounds = array<i64: 2, 3>, scalar_prefetch = 0 : i64, scratch_operands = 3 : i64, tpu.core_type = #tpu.core_type<tc>, window_params = [{transform_indices = @transform_0, window_bounds = array<i64: 16, 32>}, {transform_indices = @transform_1, window_bounds = array<i64: 32, 128>}, {transform_indices = @transform_2, window_bounds = array<i64: 1, 128>}, {transform_indices = @transform_3, window_bounds = array<i64: 1, 128>}, {transform_indices = @transform_4, window_bounds = array<i64: 16, 128>}]} {
    %c0_i32 = arith.constant 0 : i32
    %0 = arith.cmpi eq, %arg1, %c0_i32 : i32
    %1 = arith.extui %0 : i1 to i32
    %cst = arith.constant 0xFF800000 : f32
    %c0_i32_0 = arith.constant 0 : i32
    %2 = arith.cmpi ne, %1, %c0_i32_0 : i32
    scf.if %2 {
      %c0_76 = arith.constant 0 : index
      %c0_77 = arith.constant 0 : index
      %210 = vector.load %arg2[%c0_76, %c0_77] : memref<16x32xf32, #tpu.memory_space<vmem>>, vector<16x32xf32>
      %211 = arith.mulf %210, %210 : vector<16x32xf32>
      %cst_78 = arith.constant dense<0.000000e+00> : vector<16xf32>
      %212 = vector.multi_reduction <add>, %211, %cst_78 [1] : vector<16x32xf32> to vector<16xf32>
      %213 = vector.shape_cast %212 : vector<16xf32> to vector<16x1xf32>
      %cst_79 = arith.constant 1.000000e-24 : f32
      %214 = vector.broadcast %cst_79 : f32 to vector<16x1xf32>
      %215 = arith.maximumf %213, %214 : vector<16x1xf32>
      %216 = math.rsqrt %215 : vector<16x1xf32>
      %217 = vector.broadcast %216 : vector<16x1xf32> to vector<16x32xf32>
      %218 = arith.mulf %210, %217 : vector<16x32xf32>
      %c0_80 = arith.constant 0 : index
      %c0_81 = arith.constant 0 : index
      %219 = vector.load %arg7[%c0_80, %c0_81] : memref<16x32xf32, #tpu.memory_space<vmem>>, vector<16x32xf32>
      tpu.vector_store %arg7[%c0_80, %c0_81], %218 {strides = array<i32>} : memref<16x32xf32, #tpu.memory_space<vmem>>, vector<16x32xf32>,
      %220 = vector.broadcast %cst : f32 to vector<16x128xf32>
      %c0_82 = arith.constant 0 : index
      %c0_83 = arith.constant 0 : index
      %221 = vector.load %arg8[%c0_82, %c0_83] : memref<16x128xf32, #tpu.memory_space<vmem>>, vector<16x128xf32>
      tpu.vector_store %arg8[%c0_82, %c0_83], %220 {strides = array<i32>} : memref<16x128xf32, #tpu.memory_space<vmem>>, vector<16x128xf32>,
      %c0_i32_84 = arith.constant 0 : i32
      %222 = vector.broadcast %c0_i32_84 : i32 to vector<16x128xi32>
      %c0_85 = arith.constant 0 : index
      %c0_86 = arith.constant 0 : index
      %223 = vector.load %arg9[%c0_85, %c0_86] : memref<16x128xi32, #tpu.memory_space<vmem>>, vector<16x128xi32>
      tpu.vector_store %arg9[%c0_85, %c0_86], %222 {strides = array<i32>} : memref<16x128xi32, #tpu.memory_space<vmem>>, vector<16x128xi32>,
    } else {
    }
    %c0 = arith.constant 0 : index
    %c0_1 = arith.constant 0 : index
    %3 = vector.load %arg7[%c0, %c0_1] : memref<16x32xf32, #tpu.memory_space<vmem>>, vector<16x32xf32>
    %c0_2 = arith.constant 0 : index
    %c0_3 = arith.constant 0 : index
    %4 = vector.load %arg3[%c0_2, %c0_3] : memref<32x128xf32, #tpu.memory_space<vmem>>, vector<32x128xf32>
    %cst_4 = arith.constant dense<0.000000e+00> : vector<16x128xf32>
    %5 = tpu.matmul %3, %4, %cst_4 {dimension_numbers = #tpu.dot_dimension_numbers<[1], [0], [0], [1], [0, 0, 1, 1], [], []>} : vector<16x32xf32>, vector<32x128xf32>, vector<16x128xf32> -> vector<16x128xf32>
    %c0_5 = arith.constant 0 : index
    %c0_6 = arith.constant 0 : index
    %6 = vector.load %arg5[%c0_5, %c0_6] : memref<1x128xf32, #tpu.memory_space<vmem>>, vector<1x128xf32>
    %7 = vector.broadcast %6 : vector<1x128xf32> to vector<16x128xf32>
    %8 = arith.addf %5, %7 : vector<16x128xf32>
    %9 = tpu.iota {dimensions = array<i32: 1>} : vector<1x128xi32>
    %c3_i32 = arith.constant 3 : i32
    %10 = vector.broadcast %c3_i32 : i32 to vector<1x128xi32>
    %11 = arith.shli %9, %10 : vector<1x128xi32>
    %c0_7 = arith.constant 0 : index
    %c0_8 = arith.constant 0 : index
    %12 = vector.load %arg4[%c0_7, %c0_8] : memref<1x128xi32, #tpu.memory_space<vmem>>, vector<1x128xi32>
    %13 = arith.ori %11, %12 : vector<1x128xi32>
    %c0_9 = arith.constant 0 : index
    %c0_10 = arith.constant 0 : index
    %14 = vector.load %arg8[%c0_9, %c0_10] : memref<16x128xf32, #tpu.memory_space<vmem>>, vector<16x1xf32>
    %c0_11 = arith.constant 0 : index
    %c1 = arith.constant 1 : index
    %15 = vector.load %arg8[%c0_11, %c1] : memref<16x128xf32, #tpu.memory_space<vmem>>, vector<16x1xf32>
    %c0_12 = arith.constant 0 : index
    %c2 = arith.constant 2 : index
    %16 = vector.load %arg8[%c0_12, %c2] : memref<16x128xf32, #tpu.memory_space<vmem>>, vector<16x1xf32>
    %c0_13 = arith.constant 0 : index
    %c3 = arith.constant 3 : index
    %17 = vector.load %arg8[%c0_13, %c3] : memref<16x128xf32, #tpu.memory_space<vmem>>, vector<16x1xf32>
    %c0_14 = arith.constant 0 : index
    %c4 = arith.constant 4 : index
    %18 = vector.load %arg8[%c0_14, %c4] : memref<16x128xf32, #tpu.memory_space<vmem>>, vector<16x1xf32>
    %c0_15 = arith.constant 0 : index
    %c0_16 = arith.constant 0 : index
    %19 = vector.load %arg9[%c0_15, %c0_16] : memref<16x128xi32, #tpu.memory_space<vmem>>, vector<16x1xi32>
    %c0_17 = arith.constant 0 : index
    %c1_18 = arith.constant 1 : index
    %20 = vector.load %arg9[%c0_17, %c1_18] : memref<16x128xi32, #tpu.memory_space<vmem>>, vector<16x1xi32>
    %c0_19 = arith.constant 0 : index
    %c2_20 = arith.constant 2 : index
    %21 = vector.load %arg9[%c0_19, %c2_20] : memref<16x128xi32, #tpu.memory_space<vmem>>, vector<16x1xi32>
    %c0_21 = arith.constant 0 : index
    %c3_22 = arith.constant 3 : index
    %22 = vector.load %arg9[%c0_21, %c3_22] : memref<16x128xi32, #tpu.memory_space<vmem>>, vector<16x1xi32>
    %c0_23 = arith.constant 0 : index
    %c4_24 = arith.constant 4 : index
    %23 = vector.load %arg9[%c0_23, %c4_24] : memref<16x128xi32, #tpu.memory_space<vmem>>, vector<16x1xi32>
    %c0_i32_25 = arith.constant 0 : i32
    %24 = vector.broadcast %c0_i32_25 : i32 to vector<16x1xi32>
    %cst_26 = arith.constant dense<0xFF800000> : vector<16xf32>
    %25 = vector.multi_reduction <maximumf>, %8, %cst_26 [1] : vector<16x128xf32> to vector<16xf32>
    %26 = vector.shape_cast %25 : vector<16xf32> to vector<16x1xf32>
    %27 = vector.broadcast %26 : vector<16x1xf32> to vector<16x128xf32>
    %28 = arith.cmpf oeq, %8, %27 : vector<16x128xf32>
    %c1024_i32 = arith.constant 1024 : i32
    %29 = vector.shape_cast %13 : vector<1x128xi32> to vector<1x128xi32>
    %30 = vector.broadcast %29 : vector<1x128xi32> to vector<16x128xi32>
    %31 = vector.broadcast %c1024_i32 : i32 to vector<16x128xi32>
    %32 = arith.select %28, %30, %31 : vector<16x128xi1>, vector<16x128xi32>
    %cst_27 = arith.constant dense<2147483647> : vector<16xi32>
    %33 = vector.multi_reduction <minsi>, %32, %cst_27 [1] : vector<16x128xi32> to vector<16xi32>
    %34 = vector.shape_cast %33 : vector<16xi32> to vector<16x1xi32>
    %c7_i32 = arith.constant 7 : i32
    %35 = vector.broadcast %c7_i32 : i32 to vector<16x1xi32>
    %36 = arith.andi %34, %35 : vector<16x1xi32>
    %37 = arith.cmpf oge, %14, %26 : vector<16x1xf32>
    %38 = arith.maximumf %14, %26 : vector<16x1xf32>
    %39 = arith.select %37, %19, %36 : vector<16x1xi1>, vector<16x1xi32>
    %40 = arith.extui %37 : vector<16x1xi1> to vector<16x1xi32>
    %41 = arith.addi %24, %40 : vector<16x1xi32>
    %c3_i32_28 = arith.constant 3 : i32
    %42 = vector.broadcast %c3_i32_28 : i32 to vector<16x1xi32>
    %43 = arith.shrsi %34, %42 : vector<16x1xi32>
    %c-1_i32 = arith.constant -1 : i32
    %44 = vector.broadcast %c-1_i32 : i32 to vector<16x1xi32>
    %45 = arith.select %37, %44, %43 : vector<16x1xi1>, vector<16x1xi32>
    %46 = vector.broadcast %9 : vector<1x128xi32> to vector<16x128xi32>
    %47 = vector.broadcast %45 : vector<16x1xi32> to vector<16x128xi32>
    %48 = arith.cmpi eq, %46, %47 : vector<16x128xi32>
    %cst_29 = arith.constant 0xFF800000 : f32
    %49 = vector.broadcast %cst_29 : f32 to vector<16x128xf32>
    %50 = arith.select %48, %49, %8 : vector<16x128xi1>, vector<16x128xf32>
    %cst_30 = arith.constant dense<0xFF800000> : vector<16xf32>
    %51 = vector.multi_reduction <maximumf>, %50, %cst_30 [1] : vector<16x128xf32> to vector<16xf32>
    %52 = vector.shape_cast %51 : vector<16xf32> to vector<16x1xf32>
    %53 = vector.broadcast %52 : vector<16x1xf32> to vector<16x128xf32>
    %54 = arith.cmpf oeq, %50, %53 : vector<16x128xf32>
    %c1024_i32_31 = arith.constant 1024 : i32
    %55 = vector.shape_cast %13 : vector<1x128xi32> to vector<1x128xi32>
    %56 = vector.broadcast %55 : vector<1x128xi32> to vector<16x128xi32>
    %57 = vector.broadcast %c1024_i32_31 : i32 to vector<16x128xi32>
    %58 = arith.select %54, %56, %57 : vector<16x128xi1>, vector<16x128xi32>
    %cst_32 = arith.constant dense<2147483647> : vector<16xi32>
    %59 = vector.multi_reduction <minsi>, %58, %cst_32 [1] : vector<16x128xi32> to vector<16xi32>
    %60 = vector.shape_cast %59 : vector<16xi32> to vector<16x1xi32>
    %c7_i32_33 = arith.constant 7 : i32
    %61 = vector.broadcast %c7_i32_33 : i32 to vector<16x1xi32>
    %62 = arith.andi %60, %61 : vector<16x1xi32>
    %c1_i32 = arith.constant 1 : i32
    %63 = vector.broadcast %c1_i32 : i32 to vector<16x1xi32>
    %64 = arith.cmpi eq, %41, %63 : vector<16x1xi32>
    %65 = arith.select %64, %15, %14 : vector<16x1xi1>, vector<16x1xf32>
    %c1_i32_34 = arith.constant 1 : i32
    %66 = vector.broadcast %c1_i32_34 : i32 to vector<16x1xi32>
    %67 = arith.cmpi eq, %41, %66 : vector<16x1xi32>
    %68 = arith.select %67, %20, %19 : vector<16x1xi1>, vector<16x1xi32>
    %69 = arith.cmpf oge, %65, %52 : vector<16x1xf32>
    %70 = arith.maximumf %65, %52 : vector<16x1xf32>
    %71 = arith.select %69, %68, %62 : vector<16x1xi1>, vector<16x1xi32>
    %72 = arith.extui %69 : vector<16x1xi1> to vector<16x1xi32>
    %73 = arith.addi %41, %72 : vector<16x1xi32>
    %c3_i32_35 = arith.constant 3 : i32
    %74 = vector.broadcast %c3_i32_35 : i32 to vector<16x1xi32>
    %75 = arith.shrsi %60, %74 : vector<16x1xi32>
    %c-1_i32_36 = arith.constant -1 : i32
    %76 = vector.broadcast %c-1_i32_36 : i32 to vector<16x1xi32>
    %77 = arith.select %69, %76, %75 : vector<16x1xi1>, vector<16x1xi32>
    %78 = vector.broadcast %9 : vector<1x128xi32> to vector<16x128xi32>
    %79 = vector.broadcast %77 : vector<16x1xi32> to vector<16x128xi32>
    %80 = arith.cmpi eq, %78, %79 : vector<16x128xi32>
    %cst_37 = arith.constant 0xFF800000 : f32
    %81 = vector.broadcast %cst_37 : f32 to vector<16x128xf32>
    %82 = arith.select %80, %81, %50 : vector<16x128xi1>, vector<16x128xf32>
    %cst_38 = arith.constant dense<0xFF800000> : vector<16xf32>
    %83 = vector.multi_reduction <maximumf>, %82, %cst_38 [1] : vector<16x128xf32> to vector<16xf32>
    %84 = vector.shape_cast %83 : vector<16xf32> to vector<16x1xf32>
    %85 = vector.broadcast %84 : vector<16x1xf32> to vector<16x128xf32>
    %86 = arith.cmpf oeq, %82, %85 : vector<16x128xf32>
    %c1024_i32_39 = arith.constant 1024 : i32
    %87 = vector.shape_cast %13 : vector<1x128xi32> to vector<1x128xi32>
    %88 = vector.broadcast %87 : vector<1x128xi32> to vector<16x128xi32>
    %89 = vector.broadcast %c1024_i32_39 : i32 to vector<16x128xi32>
    %90 = arith.select %86, %88, %89 : vector<16x128xi1>, vector<16x128xi32>
    %cst_40 = arith.constant dense<2147483647> : vector<16xi32>
    %91 = vector.multi_reduction <minsi>, %90, %cst_40 [1] : vector<16x128xi32> to vector<16xi32>
    %92 = vector.shape_cast %91 : vector<16xi32> to vector<16x1xi32>
    %c7_i32_41 = arith.constant 7 : i32
    %93 = vector.broadcast %c7_i32_41 : i32 to vector<16x1xi32>
    %94 = arith.andi %92, %93 : vector<16x1xi32>
    %c1_i32_42 = arith.constant 1 : i32
    %95 = vector.broadcast %c1_i32_42 : i32 to vector<16x1xi32>
    %96 = arith.cmpi eq, %73, %95 : vector<16x1xi32>
    %97 = arith.select %96, %15, %14 : vector<16x1xi1>, vector<16x1xf32>
    %c2_i32 = arith.constant 2 : i32
    %98 = vector.broadcast %c2_i32 : i32 to vector<16x1xi32>
    %99 = arith.cmpi eq, %73, %98 : vector<16x1xi32>
    %100 = arith.select %99, %16, %97 : vector<16x1xi1>, vector<16x1xf32>
    %c1_i32_43 = arith.constant 1 : i32
    %101 = vector.broadcast %c1_i32_43 : i32 to vector<16x1xi32>
    %102 = arith.cmpi eq, %73, %101 : vector<16x1xi32>
    %103 = arith.select %102, %20, %19 : vector<16x1xi1>, vector<16x1xi32>
    %c2_i32_44 = arith.constant 2 : i32
    %104 = vector.broadcast %c2_i32_44 : i32 to vector<16x1xi32>
    %105 = arith.cmpi eq, %73, %104 : vector<16x1xi32>
    %106 = arith.select %105, %21, %103 : vector<16x1xi1>, vector<16x1xi32>
    %107 = arith.cmpf oge, %100, %84 : vector<16x1xf32>
    %108 = arith.maximumf %100, %84 : vector<16x1xf32>
    %109 = arith.select %107, %106, %94 : vector<16x1xi1>, vector<16x1xi32>
    %110 = arith.extui %107 : vector<16x1xi1> to vector<16x1xi32>
    %111 = arith.addi %73, %110 : vector<16x1xi32>
    %c3_i32_45 = arith.constant 3 : i32
    %112 = vector.broadcast %c3_i32_45 : i32 to vector<16x1xi32>
    %113 = arith.shrsi %92, %112 : vector<16x1xi32>
    %c-1_i32_46 = arith.constant -1 : i32
    %114 = vector.broadcast %c-1_i32_46 : i32 to vector<16x1xi32>
    %115 = arith.select %107, %114, %113 : vector<16x1xi1>, vector<16x1xi32>
    %116 = vector.broadcast %9 : vector<1x128xi32> to vector<16x128xi32>
    %117 = vector.broadcast %115 : vector<16x1xi32> to vector<16x128xi32>
    %118 = arith.cmpi eq, %116, %117 : vector<16x128xi32>
    %cst_47 = arith.constant 0xFF800000 : f32
    %119 = vector.broadcast %cst_47 : f32 to vector<16x128xf32>
    %120 = arith.select %118, %119, %82 : vector<16x128xi1>, vector<16x128xf32>
    %cst_48 = arith.constant dense<0xFF800000> : vector<16xf32>
    %121 = vector.multi_reduction <maximumf>, %120, %cst_48 [1] : vector<16x128xf32> to vector<16xf32>
    %122 = vector.shape_cast %121 : vector<16xf32> to vector<16x1xf32>
    %123 = vector.broadcast %122 : vector<16x1xf32> to vector<16x128xf32>
    %124 = arith.cmpf oeq, %120, %123 : vector<16x128xf32>
    %c1024_i32_49 = arith.constant 1024 : i32
    %125 = vector.shape_cast %13 : vector<1x128xi32> to vector<1x128xi32>
    %126 = vector.broadcast %125 : vector<1x128xi32> to vector<16x128xi32>
    %127 = vector.broadcast %c1024_i32_49 : i32 to vector<16x128xi32>
    %128 = arith.select %124, %126, %127 : vector<16x128xi1>, vector<16x128xi32>
    %cst_50 = arith.constant dense<2147483647> : vector<16xi32>
    %129 = vector.multi_reduction <minsi>, %128, %cst_50 [1] : vector<16x128xi32> to vector<16xi32>
    %130 = vector.shape_cast %129 : vector<16xi32> to vector<16x1xi32>
    %c7_i32_51 = arith.constant 7 : i32
    %131 = vector.broadcast %c7_i32_51 : i32 to vector<16x1xi32>
    %132 = arith.andi %130, %131 : vector<16x1xi32>
    %c1_i32_52 = arith.constant 1 : i32
    %133 = vector.broadcast %c1_i32_52 : i32 to vector<16x1xi32>
    %134 = arith.cmpi eq, %111, %133 : vector<16x1xi32>
    %135 = arith.select %134, %15, %14 : vector<16x1xi1>, vector<16x1xf32>
    %c2_i32_53 = arith.constant 2 : i32
    %136 = vector.broadcast %c2_i32_53 : i32 to vector<16x1xi32>
    %137 = arith.cmpi eq, %111, %136 : vector<16x1xi32>
    %138 = arith.select %137, %16, %135 : vector<16x1xi1>, vector<16x1xf32>
    %c3_i32_54 = arith.constant 3 : i32
    %139 = vector.broadcast %c3_i32_54 : i32 to vector<16x1xi32>
    %140 = arith.cmpi eq, %111, %139 : vector<16x1xi32>
    %141 = arith.select %140, %17, %138 : vector<16x1xi1>, vector<16x1xf32>
    %c1_i32_55 = arith.constant 1 : i32
    %142 = vector.broadcast %c1_i32_55 : i32 to vector<16x1xi32>
    %143 = arith.cmpi eq, %111, %142 : vector<16x1xi32>
    %144 = arith.select %143, %20, %19 : vector<16x1xi1>, vector<16x1xi32>
    %c2_i32_56 = arith.constant 2 : i32
    %145 = vector.broadcast %c2_i32_56 : i32 to vector<16x1xi32>
    %146 = arith.cmpi eq, %111, %145 : vector<16x1xi32>
    %147 = arith.select %146, %21, %144 : vector<16x1xi1>, vector<16x1xi32>
    %c3_i32_57 = arith.constant 3 : i32
    %148 = vector.broadcast %c3_i32_57 : i32 to vector<16x1xi32>
    %149 = arith.cmpi eq, %111, %148 : vector<16x1xi32>
    %150 = arith.select %149, %22, %147 : vector<16x1xi1>, vector<16x1xi32>
    %151 = arith.cmpf oge, %141, %122 : vector<16x1xf32>
    %152 = arith.maximumf %141, %122 : vector<16x1xf32>
    %153 = arith.select %151, %150, %132 : vector<16x1xi1>, vector<16x1xi32>
    %154 = arith.extui %151 : vector<16x1xi1> to vector<16x1xi32>
    %155 = arith.addi %111, %154 : vector<16x1xi32>
    %c3_i32_58 = arith.constant 3 : i32
    %156 = vector.broadcast %c3_i32_58 : i32 to vector<16x1xi32>
    %157 = arith.shrsi %130, %156 : vector<16x1xi32>
    %c-1_i32_59 = arith.constant -1 : i32
    %158 = vector.broadcast %c-1_i32_59 : i32 to vector<16x1xi32>
    %159 = arith.select %151, %158, %157 : vector<16x1xi1>, vector<16x1xi32>
    %160 = vector.broadcast %9 : vector<1x128xi32> to vector<16x128xi32>
    %161 = vector.broadcast %159 : vector<16x1xi32> to vector<16x128xi32>
    %162 = arith.cmpi eq, %160, %161 : vector<16x128xi32>
    %cst_60 = arith.constant 0xFF800000 : f32
    %163 = vector.broadcast %cst_60 : f32 to vector<16x128xf32>
    %164 = arith.select %162, %163, %120 : vector<16x128xi1>, vector<16x128xf32>
    %cst_61 = arith.constant dense<0xFF800000> : vector<16xf32>
    %165 = vector.multi_reduction <maximumf>, %164, %cst_61 [1] : vector<16x128xf32> to vector<16xf32>
    %166 = vector.shape_cast %165 : vector<16xf32> to vector<16x1xf32>
    %167 = vector.broadcast %166 : vector<16x1xf32> to vector<16x128xf32>
    %168 = arith.cmpf oeq, %164, %167 : vector<16x128xf32>
    %c1024_i32_62 = arith.constant 1024 : i32
    %169 = vector.shape_cast %13 : vector<1x128xi32> to vector<1x128xi32>
    %170 = vector.broadcast %169 : vector<1x128xi32> to vector<16x128xi32>
    %171 = vector.broadcast %c1024_i32_62 : i32 to vector<16x128xi32>
    %172 = arith.select %168, %170, %171 : vector<16x128xi1>, vector<16x128xi32>
    %cst_63 = arith.constant dense<2147483647> : vector<16xi32>
    %173 = vector.multi_reduction <minsi>, %172, %cst_63 [1] : vector<16x128xi32> to vector<16xi32>
    %174 = vector.shape_cast %173 : vector<16xi32> to vector<16x1xi32>
    %c7_i32_64 = arith.constant 7 : i32
    %175 = vector.broadcast %c7_i32_64 : i32 to vector<16x1xi32>
    %176 = arith.andi %174, %175 : vector<16x1xi32>
    %c1_i32_65 = arith.constant 1 : i32
    %177 = vector.broadcast %c1_i32_65 : i32 to vector<16x1xi32>
    %178 = arith.cmpi eq, %155, %177 : vector<16x1xi32>
    %179 = arith.select %178, %15, %14 : vector<16x1xi1>, vector<16x1xf32>
    %c2_i32_66 = arith.constant 2 : i32
    %180 = vector.broadcast %c2_i32_66 : i32 to vector<16x1xi32>
    %181 = arith.cmpi eq, %155, %180 : vector<16x1xi32>
    %182 = arith.select %181, %16, %179 : vector<16x1xi1>, vector<16x1xf32>
    %c3_i32_67 = arith.constant 3 : i32
    %183 = vector.broadcast %c3_i32_67 : i32 to vector<16x1xi32>
    %184 = arith.cmpi eq, %155, %183 : vector<16x1xi32>
    %185 = arith.select %184, %17, %182 : vector<16x1xi1>, vector<16x1xf32>
    %c4_i32 = arith.constant 4 : i32
    %186 = vector.broadcast %c4_i32 : i32 to vector<16x1xi32>
    %187 = arith.cmpi eq, %155, %186 : vector<16x1xi32>
    %188 = arith.select %187, %18, %185 : vector<16x1xi1>, vector<16x1xf32>
    %c1_i32_68 = arith.constant 1 : i32
    %189 = vector.broadcast %c1_i32_68 : i32 to vector<16x1xi32>
    %190 = arith.cmpi eq, %155, %189 : vector<16x1xi32>
    %191 = arith.select %190, %20, %19 : vector<16x1xi1>, vector<16x1xi32>
    %c2_i32_69 = arith.constant 2 : i32
    %192 = vector.broadcast %c2_i32_69 : i32 to vector<16x1xi32>
    %193 = arith.cmpi eq, %155, %192 : vector<16x1xi32>
    %194 = arith.select %193, %21, %191 : vector<16x1xi1>, vector<16x1xi32>
    %c3_i32_70 = arith.constant 3 : i32
    %195 = vector.broadcast %c3_i32_70 : i32 to vector<16x1xi32>
    %196 = arith.cmpi eq, %155, %195 : vector<16x1xi32>
    %197 = arith.select %196, %22, %194 : vector<16x1xi1>, vector<16x1xi32>
    %c4_i32_71 = arith.constant 4 : i32
    %198 = vector.broadcast %c4_i32_71 : i32 to vector<16x1xi32>
    %199 = arith.cmpi eq, %155, %198 : vector<16x1xi32>
    %200 = arith.select %199, %23, %197 : vector<16x1xi1>, vector<16x1xi32>
    %201 = arith.cmpf oge, %188, %166 : vector<16x1xf32>
    %202 = arith.maximumf %188, %166 : vector<16x1xf32>
    %203 = arith.select %201, %200, %176 : vector<16x1xi1>, vector<16x1xi32>
    %c2_i32_72 = arith.constant 2 : i32
    %204 = arith.cmpi ne, %arg1, %c2_i32_72 : i32
    %205 = arith.extui %204 : i1 to i32
    %c0_i32_73 = arith.constant 0 : i32
    %206 = arith.cmpi ne, %205, %c0_i32_73 : i32
    scf.if %206 {
      %c0_76 = arith.constant 0 : index
      %c0_77 = arith.constant 0 : index
      %210 = vector.load %arg8[%c0_76, %c0_77] : memref<16x128xf32, #tpu.memory_space<vmem>>, vector<16x1xf32>
      tpu.vector_store %arg8[%c0_76, %c0_77], %38 {strides = array<i32>} : memref<16x128xf32, #tpu.memory_space<vmem>>, vector<16x1xf32>,
      %c0_78 = arith.constant 0 : index
      %c0_79 = arith.constant 0 : index
      %211 = vector.load %arg9[%c0_78, %c0_79] : memref<16x128xi32, #tpu.memory_space<vmem>>, vector<16x1xi32>
      tpu.vector_store %arg9[%c0_78, %c0_79], %39 {strides = array<i32>} : memref<16x128xi32, #tpu.memory_space<vmem>>, vector<16x1xi32>,
      %c0_80 = arith.constant 0 : index
      %c1_81 = arith.constant 1 : index
      %212 = vector.load %arg8[%c0_80, %c1_81] : memref<16x128xf32, #tpu.memory_space<vmem>>, vector<16x1xf32>
      tpu.vector_store %arg8[%c0_80, %c1_81], %70 {strides = array<i32>} : memref<16x128xf32, #tpu.memory_space<vmem>>, vector<16x1xf32>,
      %c0_82 = arith.constant 0 : index
      %c1_83 = arith.constant 1 : index
      %213 = vector.load %arg9[%c0_82, %c1_83] : memref<16x128xi32, #tpu.memory_space<vmem>>, vector<16x1xi32>
      tpu.vector_store %arg9[%c0_82, %c1_83], %71 {strides = array<i32>} : memref<16x128xi32, #tpu.memory_space<vmem>>, vector<16x1xi32>,
      %c0_84 = arith.constant 0 : index
      %c2_85 = arith.constant 2 : index
      %214 = vector.load %arg8[%c0_84, %c2_85] : memref<16x128xf32, #tpu.memory_space<vmem>>, vector<16x1xf32>
      tpu.vector_store %arg8[%c0_84, %c2_85], %108 {strides = array<i32>} : memref<16x128xf32, #tpu.memory_space<vmem>>, vector<16x1xf32>,
      %c0_86 = arith.constant 0 : index
      %c2_87 = arith.constant 2 : index
      %215 = vector.load %arg9[%c0_86, %c2_87] : memref<16x128xi32, #tpu.memory_space<vmem>>, vector<16x1xi32>
      tpu.vector_store %arg9[%c0_86, %c2_87], %109 {strides = array<i32>} : memref<16x128xi32, #tpu.memory_space<vmem>>, vector<16x1xi32>,
      %c0_88 = arith.constant 0 : index
      %c3_89 = arith.constant 3 : index
      %216 = vector.load %arg8[%c0_88, %c3_89] : memref<16x128xf32, #tpu.memory_space<vmem>>, vector<16x1xf32>
      tpu.vector_store %arg8[%c0_88, %c3_89], %152 {strides = array<i32>} : memref<16x128xf32, #tpu.memory_space<vmem>>, vector<16x1xf32>,
      %c0_90 = arith.constant 0 : index
      %c3_91 = arith.constant 3 : index
      %217 = vector.load %arg9[%c0_90, %c3_91] : memref<16x128xi32, #tpu.memory_space<vmem>>, vector<16x1xi32>
      tpu.vector_store %arg9[%c0_90, %c3_91], %153 {strides = array<i32>} : memref<16x128xi32, #tpu.memory_space<vmem>>, vector<16x1xi32>,
      %c0_92 = arith.constant 0 : index
      %c4_93 = arith.constant 4 : index
      %218 = vector.load %arg8[%c0_92, %c4_93] : memref<16x128xf32, #tpu.memory_space<vmem>>, vector<16x1xf32>
      tpu.vector_store %arg8[%c0_92, %c4_93], %202 {strides = array<i32>} : memref<16x128xf32, #tpu.memory_space<vmem>>, vector<16x1xf32>,
      %c0_94 = arith.constant 0 : index
      %c4_95 = arith.constant 4 : index
      %219 = vector.load %arg9[%c0_94, %c4_95] : memref<16x128xi32, #tpu.memory_space<vmem>>, vector<16x1xi32>
      tpu.vector_store %arg9[%c0_94, %c4_95], %203 {strides = array<i32>} : memref<16x128xi32, #tpu.memory_space<vmem>>, vector<16x1xi32>,
    } else {
    }
    %c2_i32_74 = arith.constant 2 : i32
    %207 = arith.cmpi eq, %arg1, %c2_i32_74 : i32
    %208 = arith.extui %207 : i1 to i32
    %c0_i32_75 = arith.constant 0 : i32
    %209 = arith.cmpi ne, %208, %c0_i32_75 : i32
    scf.if %209 {
      %210 = tpu.iota {dimensions = array<i32: 1>} : vector<1x128xi32>
      %211 = vector.broadcast %210 : vector<1x128xi32> to vector<16x128xi32>
      %212 = vector.broadcast %39 : vector<16x1xi32> to vector<16x128xi32>
      %213 = arith.cmpi eq, %211, %212 : vector<16x128xi32>
      %214 = arith.extui %213 : vector<16x128xi1> to vector<16x128xi32>
      %215 = arith.sitofp %214 : vector<16x128xi32> to vector<16x128xf32>
      %cst_76 = arith.constant 1.000000e+00 : f32
      %216 = vector.broadcast %cst_76 : f32 to vector<16x1xf32>
      %217 = arith.subf %70, %38 : vector<16x1xf32>
      %cst_77 = arith.constant 14.2857141 : f32
      %218 = vector.broadcast %cst_77 : f32 to vector<16x1xf32>
      %219 = arith.mulf %217, %218 : vector<16x1xf32>
      %220 = math.exp %219 : vector<16x1xf32>
      %221 = arith.addf %216, %220 : vector<16x1xf32>
      %222 = vector.broadcast %210 : vector<1x128xi32> to vector<16x128xi32>
      %223 = vector.broadcast %71 : vector<16x1xi32> to vector<16x128xi32>
      %224 = arith.cmpi eq, %222, %223 : vector<16x128xi32>
      %225 = arith.extui %224 : vector<16x128xi1> to vector<16x128xi32>
      %226 = arith.sitofp %225 : vector<16x128xi32> to vector<16x128xf32>
      %227 = vector.broadcast %220 : vector<16x1xf32> to vector<16x128xf32>
      %228 = arith.mulf %227, %226 : vector<16x128xf32>
      %229 = arith.addf %215, %228 : vector<16x128xf32>
      %230 = arith.subf %108, %38 : vector<16x1xf32>
      %cst_78 = arith.constant 14.2857141 : f32
      %231 = vector.broadcast %cst_78 : f32 to vector<16x1xf32>
      %232 = arith.mulf %230, %231 : vector<16x1xf32>
      %233 = math.exp %232 : vector<16x1xf32>
      %234 = arith.addf %221, %233 : vector<16x1xf32>
      %235 = vector.broadcast %210 : vector<1x128xi32> to vector<16x128xi32>
      %236 = vector.broadcast %109 : vector<16x1xi32> to vector<16x128xi32>
      %237 = arith.cmpi eq, %235, %236 : vector<16x128xi32>
      %238 = arith.extui %237 : vector<16x128xi1> to vector<16x128xi32>
      %239 = arith.sitofp %238 : vector<16x128xi32> to vector<16x128xf32>
      %240 = vector.broadcast %233 : vector<16x1xf32> to vector<16x128xf32>
      %241 = arith.mulf %240, %239 : vector<16x128xf32>
      %242 = arith.addf %229, %241 : vector<16x128xf32>
      %243 = arith.subf %152, %38 : vector<16x1xf32>
      %cst_79 = arith.constant 14.2857141 : f32
      %244 = vector.broadcast %cst_79 : f32 to vector<16x1xf32>
      %245 = arith.mulf %243, %244 : vector<16x1xf32>
      %246 = math.exp %245 : vector<16x1xf32>
      %247 = arith.addf %234, %246 : vector<16x1xf32>
      %248 = vector.broadcast %210 : vector<1x128xi32> to vector<16x128xi32>
      %249 = vector.broadcast %153 : vector<16x1xi32> to vector<16x128xi32>
      %250 = arith.cmpi eq, %248, %249 : vector<16x128xi32>
      %251 = arith.extui %250 : vector<16x128xi1> to vector<16x128xi32>
      %252 = arith.sitofp %251 : vector<16x128xi32> to vector<16x128xf32>
      %253 = vector.broadcast %246 : vector<16x1xf32> to vector<16x128xf32>
      %254 = arith.mulf %253, %252 : vector<16x128xf32>
      %255 = arith.addf %242, %254 : vector<16x128xf32>
      %256 = arith.subf %202, %38 : vector<16x1xf32>
      %cst_80 = arith.constant 14.2857141 : f32
      %257 = vector.broadcast %cst_80 : f32 to vector<16x1xf32>
      %258 = arith.mulf %256, %257 : vector<16x1xf32>
      %259 = math.exp %258 : vector<16x1xf32>
      %260 = arith.addf %247, %259 : vector<16x1xf32>
      %261 = vector.broadcast %210 : vector<1x128xi32> to vector<16x128xi32>
      %262 = vector.broadcast %203 : vector<16x1xi32> to vector<16x128xi32>
      %263 = arith.cmpi eq, %261, %262 : vector<16x128xi32>
      %264 = arith.extui %263 : vector<16x128xi1> to vector<16x128xi32>
      %265 = arith.sitofp %264 : vector<16x128xi32> to vector<16x128xf32>
      %266 = vector.broadcast %259 : vector<16x1xf32> to vector<16x128xf32>
      %267 = arith.mulf %266, %265 : vector<16x128xf32>
      %268 = arith.addf %255, %267 : vector<16x128xf32>
      %269 = tpu.reciprocal %260 {approx = true} : vector<16x1xf32> -> vector<16x1xf32>
      %270 = vector.broadcast %269 : vector<16x1xf32> to vector<16x128xf32>
      %271 = arith.mulf %268, %270 : vector<16x128xf32>
      %cst_81 = arith.constant 9.99999974E-6 : f32
      %272 = vector.broadcast %cst_81 : f32 to vector<16x128xf32>
      %273 = arith.addf %271, %272 : vector<16x128xf32>
      %cst_82 = arith.constant 1.000000e+00 : f32
      %274 = vector.broadcast %cst_82 : f32 to vector<16x128xf32>
      %275 = arith.minimumf %273, %274 : vector<16x128xf32>
      %c0_83 = arith.constant 0 : index
      %c0_84 = arith.constant 0 : index
      %276 = vector.load %arg6[%c0_83, %c0_84] : memref<16x128xf32, #tpu.memory_space<vmem>>, vector<16x128xf32>
      tpu.vector_store %arg6[%c0_83, %c0_84], %275 {strides = array<i32>} : memref<16x128xf32, #tpu.memory_space<vmem>>, vector<16x128xf32>,
    } else {
    }
    return
  }
  func.func @transform_0(%arg0: i32, %arg1: i32) -> (i32, i32) {
    %c0_i32 = arith.constant 0 : i32
    %c0_i32_0 = arith.constant 0 : i32
    return %arg0, %c0_i32 : i32, i32
  }
  func.func @transform_1(%arg0: i32, %arg1: i32) -> (i32, i32) {
    %c0_i32 = arith.constant 0 : i32
    %c0_i32_0 = arith.constant 0 : i32
    return %c0_i32, %arg1 : i32, i32
  }
  func.func @transform_2(%arg0: i32, %arg1: i32) -> (i32, i32) {
    %c0_i32 = arith.constant 0 : i32
    %c0_i32_0 = arith.constant 0 : i32
    return %c0_i32, %arg1 : i32, i32
  }
  func.func @transform_3(%arg0: i32, %arg1: i32) -> (i32, i32) {
    %c0_i32 = arith.constant 0 : i32
    %c0_i32_0 = arith.constant 0 : i32
    return %c0_i32, %arg1 : i32, i32
  }
  func.func @transform_4(%arg0: i32, %arg1: i32) -> (i32, i32) {
    %c0_i32 = arith.constant 0 : i32
    %c0_i32_0 = arith.constant 0 : i32
    return %arg0, %c0_i32 : i32, i32
  }
}

</mosaic_0001>

<llo_original>
// kernel: tpu_custom_call.1
$region0: #{tpu_custom_call.1}
  #allocation0 [shape = 'u32[]', space=smem, size = 0x4, offset = 0x4, fixed_abs, tag = 'smem constant byte address 0x4 - core index']
  #allocation1 [shape = 'u32[144,128]{1,0:T(1,128)}', space=vmem, size = 0x12000, scoped, tag = 'internal scratch']
  #allocation2 [shape = 'f32[16,32]{1,0:T(8,128)}', space=vmem, size = 0x2000, scoped, tag = 'scratch operand']
  #allocation3 [shape = 'f32[16,128]{1,0:T(8,128)}', space=vmem, size = 0x2000, scoped, tag = 'scratch operand']
  #allocation4 [shape = 's32[16,128]{1,0:T(8,128)}', space=vmem, size = 0x2000, scoped, tag = 'scratch operand']
  %s0 = inlined_call_operand.hbm [shape: f32[32,32], index: 0, kind: input, shape index: {}]
  %s1 = inlined_call_operand.hbm [shape: f32[32,384], index: 1, kind: input, shape index: {}]
  %s2 = inlined_call_operand.vmem [shape: s32[1,384], index: 2, kind: input, shape index: {}]
  %s3 = inlined_call_operand.vmem [shape: f32[1,384], index: 3, kind: input, shape index: {}]
  %s4 = inlined_call_operand.hbm [shape: f32[32,128], index: 4, kind: output, shape index: {}]
  %s5 = sld [smem:[#allocation0]]
  $region69: #{tpu_custom_call.1} parent=0
    _
  %s7 = ssub.s32 1, %s5
  %s8 = scalar_select 0, %s7, %s5
  $region1: #{tpu_custom_call.1} parent=0
    #allocation5 [shape = 'u8[16384]{0}', space=vmem, size = 0x4000, scoped, tag = 'input window, operand 0']
    #allocation6 [shape = 's32[2]{0}', space=sflag, size = 0x8, scoped, tag = 'scoped memory for tpu_custom_call.1']
    #allocation7 [shape = 's32[2]{0}', space=sflag, size = 0x8, scoped, tag = 'scoped memory for tpu_custom_call.1']
    #allocation8 [shape = 'u8[32768]{0}', space=vmem, size = 0x8000, scoped, tag = 'input window, operand 1']
    #allocation9 [shape = 's32[2]{0}', space=sflag, size = 0x8, scoped, tag = 'scoped memory for tpu_custom_call.1']
    #allocation10 [shape = 'u8[16384]{0}', space=vmem, size = 0x4000, scoped, tag = 'output window, operand 0']
    %9 = vsyncpa [#allocation6], 0
    %s10 = scalar_lea.sflag [#allocation6], 1
    %11 = vsyncpa %s10, 0
    %12 = vsyncpa [#allocation9], 0
    %s13 = scalar_lea.sflag [#allocation9], 1
    %14 = vsyncpa %s13, 0
    %15 = vsyncpa [#allocation7], 0
    %s16 = scalar_lea.sflag [#allocation7], 1
    %17 = vsyncpa %s16, 0
    loop: start=0, step=1, limit=8
    $region2: #{tpu_custom_call.1} parent=1 // loop_pre_header
      _
    $region3: #{tpu_custom_call.1} parent=1 // loop_header
      %s19 = sphi 0, %s23
      %p20 = scmp.ge.s32.totalorder %s19, 8
      %s26 = sphi 0, %s38
      %s27 = sphi 0, %s34
      %s28 = sphi 0, %s26
      %s29 = sphi 0, %s27
      %s30 = sphi 0, %s28
      %s31 = sphi 0, %s29
      %s41 = sphi 0, %s43
      %s44 = sphi 0, %s41
      %s45 = sphi 0, %s44
      %s61 = sphi 0, %s45
      %s67 = sphi 0, %s69
      %s70 = sphi 0, %s67
      %s71 = sphi 0, %s70
      %s87 = sphi 0, %s71
      %s93 = sphi 0, %s95
      %s96 = sphi 0, %s93
      %s97 = sphi 0, %s96
      %s113 = sphi 0, %s97
      %s119 = sphi 0, %s121
      %s122 = sphi 0, %s119
      %s123 = sphi 0, %s122
      %s139 = sphi 0, %s123
      %s145 = sphi 0, %s147
      %s148 = sphi 0, %s145
      %s149 = sphi 0, %s148
      %s165 = sphi 0, %s149
    $region4: #{tpu_custom_call.1} parent=1 // loop_header_branch
      %22 = sbr.rel (%p20) target = $region8
    $region5: #{tpu_custom_call.1} parent=1 // loop_body
      %s24 = ssub.s32 %s19, 1
      %s25 = ssub.s32 %s19, 2
      %s32 = sadd.s32 1, %s27
      %p33 = scmp.ge.s32.totalorder %s32, 3
      %s34 = scalar_select %p33, 0, %s32
      %s35 = sadd.s32 1, %s26
      %s36 = scalar_select %p33, %s35, %s26
      %p37 = scmp.ge.s32.totalorder %s36, 2
      %s38 = scalar_select %p37, 0, %s36
      %s39 = ssub.s32 %s26, %s38
      %p40 = scmp.eq.s32.totalorder %s39, 0
      %s42 = sadd.s32 %s41, 1
      %s43 = scalar_select %p40, %s41, %s42
      %p46 = pneg %p40
      %p47 = scmp.eq.s32.totalorder %s19, 5
      %p48 = por %p46, %p47
      %p49 = scmp.ne.s32.totalorder %s41, %s44
      %p50 = scmp.eq.s32.totalorder %s19, 0
      %p51 = por %p49, %p50
      %p52 = scmp.ne.s32.totalorder %s41, %s44
      %p53 = scmp.eq.s32.totalorder %s24, 5
      %p54 = por %p52, %p53
      %p55 = scmp.ne.s32.totalorder %s44, %s45
      %p56 = scmp.eq.s32.totalorder %s24, 0
      %p57 = por %p55, %p56
      %p58 = scmp.ne.s32.totalorder %s44, %s45
      %p59 = scmp.eq.s32.totalorder %s25, 5
      %p60 = por %p58, %p59
      %p62 = scmp.ne.s32.totalorder %s45, %s61
      %p63 = scmp.eq.s32.totalorder %s25, 0
      %p64 = por %p62, %p63
      %s65 = ssub.s32 %s27, %s34
      %p66 = scmp.eq.s32.totalorder %s65, 0
      %s68 = sadd.s32 %s67, 1
      %s69 = scalar_select %p66, %s67, %s68
      %p72 = pneg %p66
      %p73 = scmp.eq.s32.totalorder %s19, 5
      %p74 = por %p72, %p73
      %p75 = scmp.ne.s32.totalorder %s67, %s70
      %p76 = scmp.eq.s32.totalorder %s19, 0
      %p77 = por %p75, %p76
      %p78 = scmp.ne.s32.totalorder %s67, %s70
      %p79 = scmp.eq.s32.totalorder %s24, 5
      %p80 = por %p78, %p79
      %p81 = scmp.ne.s32.totalorder %s70, %s71
      %p82 = scmp.eq.s32.totalorder %s24, 0
      %p83 = por %p81, %p82
      %p84 = scmp.ne.s32.totalorder %s70, %s71
      %p85 = scmp.eq.s32.totalorder %s25, 5
      %p86 = por %p84, %p85
      %p88 = scmp.ne.s32.totalorder %s71, %s87
      %p89 = scmp.eq.s32.totalorder %s25, 0
      %p90 = por %p88, %p89
      %s91 = ssub.s32 %s27, %s34
      %p92 = scmp.eq.s32.totalorder %s91, 0
      %s94 = sadd.s32 %s93, 1
      %s95 = scalar_select %p92, %s93, %s94
      %p98 = pneg %p92
      %p99 = scmp.eq.s32.totalorder %s19, 5
      %p100 = por %p98, %p99
      %p101 = scmp.ne.s32.totalorder %s93, %s96
      %p102 = scmp.eq.s32.totalorder %s19, 0
      %p103 = por %p101, %p102
      %p104 = scmp.ne.s32.totalorder %s93, %s96
      %p105 = scmp.eq.s32.totalorder %s24, 5
      %p106 = por %p104, %p105
      %p107 = scmp.ne.s32.totalorder %s96, %s97
      %p108 = scmp.eq.s32.totalorder %s24, 0
      %p109 = por %p107, %p108
      %p110 = scmp.ne.s32.totalorder %s96, %s97
      %p111 = scmp.eq.s32.totalorder %s25, 5
      %p112 = por %p110, %p111
      %p114 = scmp.ne.s32.totalorder %s97, %s113
      %p115 = scmp.eq.s32.totalorder %s25, 0
      %p116 = por %p114, %p115
      %s117 = ssub.s32 %s27, %s34
      %p118 = scmp.eq.s32.totalorder %s117, 0
      %s120 = sadd.s32 %s119, 1
      %s121 = scalar_select %p118, %s119, %s120
      %p124 = pneg %p118
      %p125 = scmp.eq.s32.totalorder %s19, 5
      %p126 = por %p124, %p125
      %p127 = scmp.ne.s32.totalorder %s119, %s122
      %p128 = scmp.eq.s32.totalorder %s19, 0
      %p129 = por %p127, %p128
      %p130 = scmp.ne.s32.totalorder %s119, %s122
      %p131 = scmp.eq.s32.totalorder %s24, 5
      %p132 = por %p130, %p131
      %p133 = scmp.ne.s32.totalorder %s122, %s123
      %p134 = scmp.eq.s32.totalorder %s24, 0
      %p135 = por %p133, %p134
      %p136 = scmp.ne.s32.totalorder %s122, %s123
      %p137 = scmp.eq.s32.totalorder %s25, 5
      %p138 = por %p136, %p137
      %p140 = scmp.ne.s32.totalorder %s123, %s139
      %p141 = scmp.eq.s32.totalorder %s25, 0
      %p142 = por %p140, %p141
      %s143 = ssub.s32 %s26, %s38
      %p144 = scmp.eq.s32.totalorder %s143, 0
      %s146 = sadd.s32 %s145, 1
      %s147 = scalar_select %p144, %s145, %s146
      %p150 = pneg %p144
      %p151 = scmp.eq.s32.totalorder %s19, 5
      %p152 = por %p150, %p151
      %p153 = scmp.ne.s32.totalorder %s145, %s148
      %p154 = scmp.eq.s32.totalorder %s19, 0
      %p155 = por %p153, %p154
      %p156 = scmp.ne.s32.totalorder %s145, %s148
      %p157 = scmp.eq.s32.totalorder %s24, 5
      %p158 = por %p156, %p157
      %p159 = scmp.ne.s32.totalorder %s148, %s149
      %p160 = scmp.eq.s32.totalorder %s24, 0
      %p161 = por %p159, %p160
      %p162 = scmp.ne.s32.totalorder %s148, %s149
      %p163 = scmp.eq.s32.totalorder %s25, 5
      %p164 = por %p162, %p163
      %p166 = scmp.ne.s32.totalorder %s149, %s165
      %p167 = scmp.eq.s32.totalorder %s25, 0
      %p168 = por %p166, %p167
      %p169 = scmp.le.s32.totalorder 1, %s19
      %p170 = scmp.lt.s32.totalorder %s19, 7
      %p171 = pnand %p169, %p170
      %p172 = pneg %p171
      // Predicated region
      $region9: #{tpu_custom_call.1} parent=5 // pred_check
        _
      $region10: #{tpu_custom_call.1} parent=5 // pred_check_branch
        %174 = sbr.rel (%p171) target = $region12
      $region11: #{tpu_custom_call.1} parent=5 // pred_region
        %s175 = ssub.s32 %s19, 1
      $region12: #{tpu_custom_call.1} parent=5 // pred_fallthru
        _
      %p176 = scmp.lt.s32.totalorder %s19, 6
      // Predicated region
      $region13: #{tpu_custom_call.1} parent=5 // pred_check
        %p177 = pneg %p176
      $region14: #{tpu_custom_call.1} parent=5 // pred_check_branch
        %179 = sbr.rel (%p177) target = $region16
      $region15: #{tpu_custom_call.1} parent=5 // pred_region
        // Predicated region
        $region17: #{tpu_custom_call.1} parent=15 // pred_check
          %p180 = pneg %p51
        $region18: #{tpu_custom_call.1} parent=15 // pred_check_branch
          %182 = sbr.rel (%p180) target = $region20
        $region19: #{tpu_custom_call.1} parent=15 // pred_region
          %s183 = sand.u32 %s41, 1
          %s184 = scalar_lea.sflag [#allocation6], %s183
          %s185 = sand.u32 %s41, 1
          %s186 = smul.addr %s185, 16
          %s187 = scalar_lea.vmem [#allocation5], %s186
          %s188 = smul.u32 2, %s26
          %s190 = ssub.s32 256, 256
          %191 = vsyncadd %s184, %s190
          %s192 = smul.addr %s188, 128
          %s193 = scalar_lea.hbm %s0, %s192
          %s194 = sshll.u32 %s187, 4
          %s195 = int_to_ptr.vmem [resolvable:$true] %s194
          %200 = dma.hbm_to_vmem [thread:$0]  %s193, 256, %s195, %s184, 128, 128, 8
        $region20: #{tpu_custom_call.1} parent=15 // pred_fallthru
          _
        // Predicated region
        $region21: #{tpu_custom_call.1} parent=15 // pred_check
          %p201 = pneg %p77
        $region22: #{tpu_custom_call.1} parent=15 // pred_check_branch
          %203 = sbr.rel (%p201) target = $region24
        $region23: #{tpu_custom_call.1} parent=15 // pred_region
          %s204 = sand.u32 %s67, 1
          %s205 = scalar_lea.sflag [#allocation9], %s204
          %s206 = sand.u32 %s67, 1
          %s207 = smul.addr %s206, 32
          %s208 = scalar_lea.vmem [#allocation8], %s207
          %s210 = ssub.s32 512, 512
          %211 = vsyncadd %s205, %s210
          %s212 = smul.addr %s27, 128
          %s213 = scalar_lea.hbm %s1, %s212
          %s214 = sshll.u32 %s208, 4
          %s215 = int_to_ptr.vmem [resolvable:$true] %s214
          %220 = dma.hbm_to_vmem [thread:$0]  %s213, 512, %s215, %s205, 384, 128, 8
        $region24: #{tpu_custom_call.1} parent=15 // pred_fallthru
          _
        // Predicated region
        $region25: #{tpu_custom_call.1} parent=15 // pred_check
          %p221 = pneg %p103
        $region26: #{tpu_custom_call.1} parent=15 // pred_check_branch
          %223 = sbr.rel (%p221) target = $region28
        $region27: #{tpu_custom_call.1} parent=15 // pred_region
          %p224 = scmp.lt.s32.totalorder %s27, 2
          %s225 = scalar_select %p224, %s27, 2
          %s226 = scalar_lea.vmem %s2, %s225
        $region28: #{tpu_custom_call.1} parent=15 // pred_fallthru
          _
        // Predicated region
        $region29: #{tpu_custom_call.1} parent=15 // pred_check
          %p227 = pneg %p129
        $region30: #{tpu_custom_call.1} parent=15 // pred_check_branch
          %229 = sbr.rel (%p227) target = $region32
        $region31: #{tpu_custom_call.1} parent=15 // pred_region
          %p230 = scmp.lt.s32.totalorder %s27, 2
          %s231 = scalar_select %p230, %s27, 2
          %s232 = scalar_lea.vmem %s3, %s231
        $region32: #{tpu_custom_call.1} parent=15 // pred_fallthru
          _
      $region16: #{tpu_custom_call.1} parent=5 // pred_fallthru
        _
      %p233 = scmp.le.s32.totalorder 1, %s19
      %p234 = scmp.lt.s32.totalorder %s19, 7
      %p235 = pnand %p233, %p234
      %p236 = pneg %p235
      // Predicated region
      $region33: #{tpu_custom_call.1} parent=5 // pred_check
        _
      $region34: #{tpu_custom_call.1} parent=5 // pred_check_branch
        %238 = sbr.rel (%p235) target = $region36
      $region35: #{tpu_custom_call.1} parent=5 // pred_region
        %s239 = ssub.s32 %s19, 1
        %s240 = sand.u32 %s44, 1
        %s241 = scalar_lea.sflag [#allocation6], %s240
        %s242 = sand.u32 %s44, 1
        %s243 = smul.addr %s242, 16
        %s244 = scalar_lea.vmem [#allocation5], %s243
        // Predicated region
        $region37: #{tpu_custom_call.1} parent=35 // pred_check
          %p245 = pneg %p57
        $region38: #{tpu_custom_call.1} parent=35 // pred_check_branch
          %247 = sbr.rel (%p245) target = $region40
        $region39: #{tpu_custom_call.1} parent=35 // pred_region
          %248 = dma.done %s241, 256
        $region40: #{tpu_custom_call.1} parent=35 // pred_fallthru
          _
        %s249 = sand.u32 %s70, 1
        %s250 = scalar_lea.sflag [#allocation9], %s249
        %s251 = sand.u32 %s70, 1
        %s252 = smul.addr %s251, 32
        %s253 = scalar_lea.vmem [#allocation8], %s252
        // Predicated region
        $region41: #{tpu_custom_call.1} parent=35 // pred_check
          %p254 = pneg %p83
        $region42: #{tpu_custom_call.1} parent=35 // pred_check_branch
          %256 = sbr.rel (%p254) target = $region44
        $region43: #{tpu_custom_call.1} parent=35 // pred_region
          %257 = dma.done %s250, 512
        $region44: #{tpu_custom_call.1} parent=35 // pred_fallthru
          _
        %s258 = sand.u32 %s44, 1
        %s259 = scalar_lea.sflag [#allocation6], %s258
        %s260 = sand.u32 %s44, 1
        %s261 = smul.addr %s260, 16
        %s262 = scalar_lea.vmem [#allocation5], %s261
        %p263 = pneg %p57
        %p264 = pneg %p54
        %s265 = sand.u32 %s70, 1
        %s266 = scalar_lea.sflag [#allocation9], %s265
        %s267 = sand.u32 %s70, 1
        %s268 = smul.addr %s267, 32
        %s269 = scalar_lea.vmem [#allocation8], %s268
        %p270 = pneg %p83
        %p271 = pneg %p80
        %p272 = scmp.lt.s32.totalorder %s29, 2
        %s273 = scalar_select %p272, %s29, 2
        %s274 = scalar_lea.vmem %s2, %s273
        %p275 = pneg %p109
        %p276 = pneg %p106
        %p277 = scmp.lt.s32.totalorder %s29, 2
        %s278 = scalar_select %p277, %s29, 2
        %s279 = scalar_lea.vmem %s3, %s278
        %p280 = pneg %p135
        %p281 = pneg %p132
        %p282 = pneg %p161
        %p283 = pneg %p158
        %s284 = sand.u32 %s148, 1
        %s285 = scalar_lea.sflag [#allocation7], %s284
        %s286 = sand.u32 %s148, 1
        %s287 = smul.addr %s286, 16
        %s288 = scalar_lea.vmem [#allocation10], %s287
        %s289 = smul.u32 2, %s28
        %p290 = scmp.lt.s32.totalorder %s29, 2
        %s291 = scalar_select %p290, %s29, 2
        %s292 = scalar_lea.vmem %s2, %s291
        %p293 = scmp.lt.s32.totalorder %s29, 2
        %s294 = scalar_select %p293, %s29, 2
        %s295 = scalar_lea.vmem %s3, %s294
        %s296 = smul.u32 2, %s28
        %p297 = scmp.eq.s32.totalorder %s29, 0
        // Predicated region
        $region45: #{tpu_custom_call.1} parent=35 // pred_check
          %p298 = pneg %p297
        $region46: #{tpu_custom_call.1} parent=35 // pred_check_branch
          %300 = sbr.rel (%p298) target = $region48
        $region47: #{tpu_custom_call.1} parent=35 // pred_region
          %v301 = vld [vmem:[%s244] sm:$0xff]
          %v302 = vld [vmem:[%s244 + $0x8] sm:$0xff]
          %v303 = vmul.f32 %v301, %v301
          %v304 = vmul.f32 %v302, %v302
          %vm305 = vcmask 261120
          %v306 = vsel %vm305, %v303, 0.0
          %307 = vadd.xlane.f32.xlu0 %v306
          %v308 = vpop.xlane.xlu0 %307
          %v309 = vsel %vm305, %v304, 0.0
          %310 = vadd.xlane.f32.xlu0 %v309
          %v311 = vpop.xlane.xlu0 %310
          %v312 = vmax.f32 %v308, 1e-24
          %v313 = vmax.f32 %v311, 1e-24
          %v314 = vrsqrt.pop %v312
          %v315 = vrsqrt.pop %v313
          %v316 = vmul.f32 %v301, %v314
          %v317 = vmul.f32 %v302, %v315
          %318 = vst.msk [vmem:[#allocation2] sm:$0xff] %vm305, %v316
          %319 = vst.msk [vmem:[#allocation2 + $0x8] sm:$0xff] %vm305, %v317
          %320 = vst [vmem:[#allocation3] sm:$0xff] -inf
          %321 = vst [vmem:[#allocation3 + $0x8] sm:$0xff] -inf
          %322 = vst [vmem:[#allocation4] sm:$0xff] 0
          %323 = vst [vmem:[#allocation4 + $0x8] sm:$0xff] 0
        $region48: #{tpu_custom_call.1} parent=35 // pred_fallthru
          _
        %v324 = vld [vmem:[#allocation2] sm:$0xff]
        %v325 = vld [vmem:[#allocation2 + $0x8] sm:$0xff]
        %v326 = vld [vmem:[%s253] sm:$0xff]
        %v327 = vld [vmem:[%s253 + $0x8] sm:$0xff]
        %v328 = vld [vmem:[%s253 + $0x10] sm:$0xff]
        %v329 = vld [vmem:[%s253 + $0x18] sm:$0xff]
        %v330 = vld [vmem:[%s295] sm:$0x1]
        %v332 = vlaneseq
        %v333 = vshrl.u32 %v332, 7
        %v334 = vsub.s32 0, %v333
        %v335 = vrot.slane %v330, %v334
        %vm337 = vcmask 261120
        %v339 = vsel %vm337, %v324, 0
        %v342 = vsel %vm337, %v325, 0
        %344 = vmatprep.subr.mxu0 0.0
        %345 = vmatpush1.msra.mxu0 %v326
        %346 = vmatprep.subr.mxu0 0.0
        %347 = vmatpush1.msra.mxu0 %v327
        %348 = vmatprep.subr.mxu0 0.0
        %349 = vmatpush1.msra.mxu0 %v328
        %350 = vmatprep.subr.mxu0 0.0
        %351 = vmatpush1.msra.mxu0 %v329
        %352 = vmatprep.subr.mxu0 0.0
        %353 = vmatpush1.msra.mxu0 0.0
        %354 = vmatprep.subr.mxu0 0.0
        %355 = vmatpush1.msra.mxu0 0.0
        %356 = vmatprep.subr.mxu0 0.0
        %357 = vmatpush1.msra.mxu0 0.0
        %358 = vmatprep.subr.mxu0 0.0
        %359 = vmatpush1.msra.mxu0 0.0
        %360 = vmatprep.subr.mxu0 0.0
        %361 = vmatpush1.msra.mxu0 0.0
        %362 = vmatprep.subr.mxu0 0.0
        %363 = vmatpush1.msra.mxu0 0.0
        %364 = vmatprep.subr.mxu0 0.0
        %365 = vmatpush1.msra.mxu0 0.0
        %366 = vmatprep.subr.mxu0 0.0
        %367 = vmatpush1.msra.mxu0 0.0
        %368 = vmatprep.subr.mxu0 0.0
        %369 = vmatpush1.msra.mxu0 0.0
        %370 = vmatprep.subr.mxu0 0.0
        %371 = vmatpush1.msra.mxu0 0.0
        %372 = vmatprep.subr.mxu0 0.0
        %373 = vmatpush1.msra.mxu0 0.0
        %374 = vmatprep.subr.mxu0 0.0
        %375 = vmatpush1.msra.mxu0 0.0
        %376 = vmatprep.subr.mxu0 0.0
        %377 = vmatpush1.msra.mxu0 0.0
        %378 = vmatprep.subr.mxu0 0.0
        %379 = vmatpush1.msra.mxu0 0.0
        %380 = vmatprep.subr.mxu0 0.0
        %381 = vmatpush1.msra.mxu0 0.0
        %382 = vmatprep.subr.mxu0 0.0
        %383 = vmatpush1.msra.mxu0 0.0
        %384 = vmatprep.subr.mxu0 0.0
        %385 = vmatpush1.msra.mxu0 0.0
        %386 = vmatprep.subr.mxu0 0.0
        %387 = vmatpush1.msra.mxu0 0.0
        %388 = vmatprep.subr.mxu0 0.0
        %389 = vmatpush1.msra.mxu0 0.0
        %390 = vmatprep.subr.mxu0 0.0
        %391 = vmatpush1.msra.mxu0 0.0
        %392 = vmatprep.subr.mxu0 0.0
        %393 = vmatpush1.msra.mxu0 0.0
        %394 = vmatprep.subr.mxu0 0.0
        %395 = vmatpush1.msra.mxu0 0.0
        %396 = vmatprep.subr.mxu0 0.0
        %397 = vmatpush1.msra.mxu0 0.0
        %398 = vmatprep.subr.mxu0 0.0
        %399 = vmatpush1.msra.mxu0 0.0
        %400 = vmatprep.subr.mxu0 0.0
        %401 = vmatpush1.msra.mxu0 0.0
        %402 = vmatprep.subr.mxu0 0.0
        %403 = vmatpush1.msra.mxu0 0.0
        %404 = vmatprep.subr.mxu0 0.0
        %405 = vmatpush1.msra.mxu0 0.0
        %406 = vmatprep.subr.mxu0 0.0
        %407 = vmatpush1.msra.mxu0 0.0
        %408 = vmatprep.mubr.f32.mxu0 0.0
        %409 = vmatmul.mubr.f32.gmra.mrb[0].mxu0 %v339
        %v410 = vpop.f32.mrb[0].mxu0
        %v411 = vadd.f32 %v335, %v410
        %v412 = vpop.f32.mrb[0].mxu0
        %413 = vmatprep.mubr.f32.mxu0 0.0
        %414 = vmatmul.mubr.f32.gmra.mrb[0].mxu0 %v342
        %v415 = vpop.f32.mrb[0].mxu0
        %v416 = vadd.f32 %v335, %v415
        %v417 = vpop.f32.mrb[0].mxu0
        %418 = vdwg.mxu0
        %v419 = vlaneseq
        %v420 = vand.u32 %v419, 127
        %v421 = vshll.u32 %v420, 3
        %v422 = vld [vmem:[%s292] sm:$0x1]
        %v423 = vor.u32 %v421, %v422
        %v424 = vld [vmem:[#allocation3] sm:$0xff]
        %v425 = vld [vmem:[#allocation3 + $0x8] sm:$0xff]
        %v426 = vld [vmem:[#allocation4] sm:$0xff]
        %v427 = vld [vmem:[#allocation4 + $0x8] sm:$0xff]
        %428 = vmax.xlane.f32.xlu0 %v411
        %v429 = vpop.xlane.xlu0 %428
        %430 = vmax.xlane.f32.xlu0 %v416
        %v431 = vpop.xlane.xlu0 %430
        %vm432 = vcmp.eq.f32.partialorder %v411, %v429
        %vm433 = vcmp.eq.f32.partialorder %v416, %v431
        %v434 = vlaneseq
        %v435 = vshrl.u32 %v434, 7
        %v436 = vsub.s32 0, %v435
        %v437 = vrot.slane %v423, %v436
        %v438 = vsel %vm432, %v437, 1024
        %v439 = vsel %vm433, %v437, 1024
        %v440 = vand.u32 %v438, 65535
        %v441 = vshra.s32 %v438, 16
        %v442 = vcvt.s32.f32 %v440
        %v443 = vcvt.s32.f32 %v441
        %444 = vmin.xlane.f32.xlu0 %v443
        %v445 = vpop.xlane.xlu0 %444
        %vm446 = vcmp.eq.f32.partialorder %v443, %v445
        %v447 = vsel %vm446, %v442, inf
        %448 = vmin.xlane.f32.xlu0 %v447
        %v449 = vpop.xlane.xlu0 %448
        %v450 = vcvt.f32.s32 %v449
        %v451 = vcvt.f32.s32 %v445
        %v452 = vshll.u32 %v451, 16
        %v453 = vadd.s32 %v452, %v450
        %v454 = vand.u32 %v439, 65535
        %v455 = vshra.s32 %v439, 16
        %v456 = vcvt.s32.f32 %v454
        %v457 = vcvt.s32.f32 %v455
        %458 = vmin.xlane.f32.xlu0 %v457
        %v459 = vpop.xlane.xlu0 %458
        %vm460 = vcmp.eq.f32.partialorder %v457, %v459
        %v461 = vsel %vm460, %v456, inf
        %462 = vmin.xlane.f32.xlu0 %v461
        %v463 = vpop.xlane.xlu0 %462
        %v464 = vcvt.f32.s32 %v463
        %v465 = vcvt.f32.s32 %v459
        %v466 = vshll.u32 %v465, 16
        %v467 = vadd.s32 %v466, %v464
        %v468 = vand.u32 %v453, 7
        %v469 = vand.u32 %v467, 7
        %vm470 = vcmp.ge.f32.partialorder %v424, %v429
        %vm471 = vcmp.ge.f32.partialorder %v425, %v431
        %v472 = vmax.f32 %v424, %v429
        %v473 = vmax.f32 %v425, %v431
        %v474 = vsel %vm470, %v426, %v468
        %v475 = vsel %vm471, %v427, %v469
        %v476 = vsel %vm470, 1, 0
        %v477 = vsel %vm471, 1, 0
        %v478 = vshra.s32 %v453, 3
        %v479 = vshra.s32 %v467, 3
        %v480 = vsel %vm470, 4294967295, %v478
        %v481 = vsel %vm471, 4294967295, %v479
        %482 = vset.pattern.permute.xlu0 0
        %483 = vperm.xlu0 %482, %v480
        %v484 = vpop.permute.xlu0 %483
        %485 = vset.pattern.permute.xlu0 0
        %486 = vperm.xlu0 %485, %v481
        %v487 = vpop.permute.xlu0 %486
        %vm488 = vcmp.eq.s32.totalorder %v420, %v484
        %vm489 = vcmp.eq.s32.totalorder %v420, %v487
        %v490 = vsel %vm488, -inf, %v411
        %v491 = vsel %vm489, -inf, %v416
        %492 = vmax.xlane.f32.xlu0 %v490
        %v493 = vpop.xlane.xlu0 %492
        %494 = vmax.xlane.f32.xlu0 %v491
        %v495 = vpop.xlane.xlu0 %494
        %vm496 = vcmp.eq.f32.partialorder %v490, %v493
        %vm497 = vcmp.eq.f32.partialorder %v491, %v495
        %v498 = vsel %vm496, %v437, 1024
        %v499 = vsel %vm497, %v437, 1024
        %v500 = vand.u32 %v498, 65535
        %v501 = vshra.s32 %v498, 16
        %v502 = vcvt.s32.f32 %v500
        %v503 = vcvt.s32.f32 %v501
        %504 = vmin.xlane.f32.xlu0 %v503
        %v505 = vpop.xlane.xlu0 %504
        %vm506 = vcmp.eq.f32.partialorder %v503, %v505
        %v507 = vsel %vm506, %v502, inf
        %508 = vmin.xlane.f32.xlu0 %v507
        %v509 = vpop.xlane.xlu0 %508
        %v510 = vcvt.f32.s32 %v509
        %v511 = vcvt.f32.s32 %v505
        %v512 = vshll.u32 %v511, 16
        %v513 = vadd.s32 %v512, %v510
        %v514 = vand.u32 %v499, 65535
        %v515 = vshra.s32 %v499, 16
        %v516 = vcvt.s32.f32 %v514
        %v517 = vcvt.s32.f32 %v515
        %518 = vmin.xlane.f32.xlu0 %v517
        %v519 = vpop.xlane.xlu0 %518
        %vm520 = vcmp.eq.f32.partialorder %v517, %v519
        %v521 = vsel %vm520, %v516, inf
        %522 = vmin.xlane.f32.xlu0 %v521
        %v523 = vpop.xlane.xlu0 %522
        %v524 = vcvt.f32.s32 %v523
        %v525 = vcvt.f32.s32 %v519
        %v526 = vshll.u32 %v525, 16
        %v527 = vadd.s32 %v526, %v524
        %v528 = vand.u32 %v513, 7
        %v529 = vand.u32 %v527, 7
        %vm530 = vcmp.eq.s32.totalorder %v476, 1
        %vm531 = vcmp.eq.s32.totalorder %v477, 1
        %534 = vrot.lane.b32.xlu0 %v424, 127
        %v535 = vpop.permute.xlu0 %534
        %536 = vrot.lane.b32.xlu0 %v425, 127
        %v537 = vpop.permute.xlu0 %536
        %v540 = vsel %vm530, %v535, %v424
        %v541 = vsel %vm531, %v537, %v425
        %542 = vrot.lane.b32.xlu0 %v426, 127
        %v543 = vpop.permute.xlu0 %542
        %544 = vrot.lane.b32.xlu0 %v427, 127
        %v545 = vpop.permute.xlu0 %544
        %v546 = vsel %vm530, %v543, %v426
        %v547 = vsel %vm531, %v545, %v427
        %vm548 = vcmp.ge.f32.partialorder %v540, %v493
        %vm549 = vcmp.ge.f32.partialorder %v541, %v495
        %v550 = vmax.f32 %v540, %v493
        %v551 = vmax.f32 %v541, %v495
        %v552 = vsel %vm548, %v546, %v528
        %v553 = vsel %vm549, %v547, %v529
        %v554 = vsel %vm548, 1, 0
        %v555 = vsel %vm549, 1, 0
        %v556 = vadd.s32 %v476, %v554
        %v557 = vadd.s32 %v477, %v555
        %v558 = vshra.s32 %v513, 3
        %v559 = vshra.s32 %v527, 3
        %v560 = vsel %vm548, 4294967295, %v558
        %v561 = vsel %vm549, 4294967295, %v559
        %562 = vset.pattern.permute.xlu0 0
        %563 = vperm.xlu0 %562, %v560
        %v564 = vpop.permute.xlu0 %563
        %565 = vset.pattern.permute.xlu0 0
        %566 = vperm.xlu0 %565, %v561
        %v567 = vpop.permute.xlu0 %566
        %vm568 = vcmp.eq.s32.totalorder %v420, %v564
        %vm569 = vcmp.eq.s32.totalorder %v420, %v567
        %v570 = vsel %vm568, -inf, %v490
        %v571 = vsel %vm569, -inf, %v491
        %572 = vmax.xlane.f32.xlu0 %v570
        %v573 = vpop.xlane.xlu0 %572
        %574 = vmax.xlane.f32.xlu0 %v571
        %v575 = vpop.xlane.xlu0 %574
        %vm576 = vcmp.eq.f32.partialorder %v570, %v573
        %vm577 = vcmp.eq.f32.partialorder %v571, %v575
        %v578 = vsel %vm576, %v437, 1024
        %v579 = vsel %vm577, %v437, 1024
        %v580 = vand.u32 %v578, 65535
        %v581 = vshra.s32 %v578, 16
        %v582 = vcvt.s32.f32 %v580
        %v583 = vcvt.s32.f32 %v581
        %584 = vmin.xlane.f32.xlu0 %v583
        %v585 = vpop.xlane.xlu0 %584
        %vm586 = vcmp.eq.f32.partialorder %v583, %v585
        %v587 = vsel %vm586, %v582, inf
        %588 = vmin.xlane.f32.xlu0 %v587
        %v589 = vpop.xlane.xlu0 %588
        %v590 = vcvt.f32.s32 %v589
        %v591 = vcvt.f32.s32 %v585
        %v592 = vshll.u32 %v591, 16
        %v593 = vadd.s32 %v592, %v590
        %v594 = vand.u32 %v579, 65535
        %v595 = vshra.s32 %v579, 16
        %v596 = vcvt.s32.f32 %v594
        %v597 = vcvt.s32.f32 %v595
        %598 = vmin.xlane.f32.xlu0 %v597
        %v599 = vpop.xlane.xlu0 %598
        %vm600 = vcmp.eq.f32.partialorder %v597, %v599
        %v601 = vsel %vm600, %v596, inf
        %602 = vmin.xlane.f32.xlu0 %v601
        %v603 = vpop.xlane.xlu0 %602
        %v604 = vcvt.f32.s32 %v603
        %v605 = vcvt.f32.s32 %v599
        %v606 = vshll.u32 %v605, 16
        %v607 = vadd.s32 %v606, %v604
        %v608 = vand.u32 %v593, 7
        %v609 = vand.u32 %v607, 7
        %vm610 = vcmp.eq.s32.totalorder %v556, 1
        %vm611 = vcmp.eq.s32.totalorder %v557, 1
        %v612 = vsel %vm610, %v535, %v424
        %v613 = vsel %vm611, %v537, %v425
        %vm614 = vcmp.eq.s32.totalorder %v556, 2
        %vm615 = vcmp.eq.s32.totalorder %v557, 2
        %616 = vrot.lane.b32.xlu0 %v424, 126
        %v617 = vpop.permute.xlu0 %616
        %618 = vrot.lane.b32.xlu0 %v425, 126
        %v619 = vpop.permute.xlu0 %618
        %v622 = vsel %vm614, %v617, %v612
        %v623 = vsel %vm615, %v619, %v613
        %v624 = vsel %vm610, %v543, %v426
        %v625 = vsel %vm611, %v545, %v427
        %626 = vrot.lane.b32.xlu0 %v426, 126
        %v627 = vpop.permute.xlu0 %626
        %628 = vrot.lane.b32.xlu0 %v427, 126
        %v629 = vpop.permute.xlu0 %628
        %v630 = vsel %vm614, %v627, %v624
        %v631 = vsel %vm615, %v629, %v625
        %vm632 = vcmp.ge.f32.partialorder %v622, %v573
        %vm633 = vcmp.ge.f32.partialorder %v623, %v575
        %v634 = vmax.f32 %v622, %v573
        %v635 = vmax.f32 %v623, %v575
        %v636 = vsel %vm632, %v630, %v608
        %v637 = vsel %vm633, %v631, %v609
        %v638 = vsel %vm632, 1, 0
        %v639 = vsel %vm633, 1, 0
        %v640 = vadd.s32 %v556, %v638
        %v641 = vadd.s32 %v557, %v639
        %v642 = vshra.s32 %v593, 3
        %v643 = vshra.s32 %v607, 3
        %v644 = vsel %vm632, 4294967295, %v642
        %v645 = vsel %vm633, 4294967295, %v643
        %646 = vset.pattern.permute.xlu0 0
        %647 = vperm.xlu0 %646, %v644
        %v648 = vpop.permute.xlu0 %647
        %649 = vset.pattern.permute.xlu0 0
        %650 = vperm.xlu0 %649, %v645
        %v651 = vpop.permute.xlu0 %650
        %vm652 = vcmp.eq.s32.totalorder %v420, %v648
        %vm653 = vcmp.eq.s32.totalorder %v420, %v651
        %v654 = vsel %vm652, -inf, %v570
        %v655 = vsel %vm653, -inf, %v571
        %656 = vmax.xlane.f32.xlu0 %v654
        %v657 = vpop.xlane.xlu0 %656
        %658 = vmax.xlane.f32.xlu0 %v655
        %v659 = vpop.xlane.xlu0 %658
        %vm660 = vcmp.eq.f32.partialorder %v654, %v657
        %vm661 = vcmp.eq.f32.partialorder %v655, %v659
        %v662 = vsel %vm660, %v437, 1024
        %v663 = vsel %vm661, %v437, 1024
        %v664 = vand.u32 %v662, 65535
        %v665 = vshra.s32 %v662, 16
        %v666 = vcvt.s32.f32 %v664
        %v667 = vcvt.s32.f32 %v665
        %668 = vmin.xlane.f32.xlu0 %v667
        %v669 = vpop.xlane.xlu0 %668
        %vm670 = vcmp.eq.f32.partialorder %v667, %v669
        %v671 = vsel %vm670, %v666, inf
        %672 = vmin.xlane.f32.xlu0 %v671
        %v673 = vpop.xlane.xlu0 %672
        %v674 = vcvt.f32.s32 %v673
        %v675 = vcvt.f32.s32 %v669
        %v676 = vshll.u32 %v675, 16
        %v677 = vadd.s32 %v676, %v674
        %v678 = vand.u32 %v663, 65535
        %v679 = vshra.s32 %v663, 16
        %v680 = vcvt.s32.f32 %v678
        %v681 = vcvt.s32.f32 %v679
        %682 = vmin.xlane.f32.xlu0 %v681
        %v683 = vpop.xlane.xlu0 %682
        %vm684 = vcmp.eq.f32.partialorder %v681, %v683
        %v685 = vsel %vm684, %v680, inf
        %686 = vmin.xlane.f32.xlu0 %v685
        %v687 = vpop.xlane.xlu0 %686
        %v688 = vcvt.f32.s32 %v687
        %v689 = vcvt.f32.s32 %v683
        %v690 = vshll.u32 %v689, 16
        %v691 = vadd.s32 %v690, %v688
        %v692 = vand.u32 %v677, 7
        %v693 = vand.u32 %v691, 7
        %vm694 = vcmp.eq.s32.totalorder %v640, 1
        %vm695 = vcmp.eq.s32.totalorder %v641, 1
        %v696 = vsel %vm694, %v535, %v424
        %v697 = vsel %vm695, %v537, %v425
        %vm698 = vcmp.eq.s32.totalorder %v640, 2
        %vm699 = vcmp.eq.s32.totalorder %v641, 2
        %v700 = vsel %vm698, %v617, %v696
        %v701 = vsel %vm699, %v619, %v697
        %vm702 = vcmp.eq.s32.totalorder %v640, 3
        %vm703 = vcmp.eq.s32.totalorder %v641, 3
        %704 = vrot.lane.b32.xlu0 %v424, 125
        %v705 = vpop.permute.xlu0 %704
        %706 = vrot.lane.b32.xlu0 %v425, 125
        %v707 = vpop.permute.xlu0 %706
        %v710 = vsel %vm702, %v705, %v700
        %v711 = vsel %vm703, %v707, %v701
        %v712 = vsel %vm694, %v543, %v426
        %v713 = vsel %vm695, %v545, %v427
        %v714 = vsel %vm698, %v627, %v712
        %v715 = vsel %vm699, %v629, %v713
        %716 = vrot.lane.b32.xlu0 %v426, 125
        %v717 = vpop.permute.xlu0 %716
        %718 = vrot.lane.b32.xlu0 %v427, 125
        %v719 = vpop.permute.xlu0 %718
        %v720 = vsel %vm702, %v717, %v714
        %v721 = vsel %vm703, %v719, %v715
        %vm722 = vcmp.ge.f32.partialorder %v710, %v657
        %vm723 = vcmp.ge.f32.partialorder %v711, %v659
        %v724 = vmax.f32 %v710, %v657
        %v725 = vmax.f32 %v711, %v659
        %v726 = vsel %vm722, %v720, %v692
        %v727 = vsel %vm723, %v721, %v693
        %v728 = vsel %vm722, 1, 0
        %v729 = vsel %vm723, 1, 0
        %v730 = vadd.s32 %v640, %v728
        %v731 = vadd.s32 %v641, %v729
        %v732 = vshra.s32 %v677, 3
        %v733 = vshra.s32 %v691, 3
        %v734 = vsel %vm722, 4294967295, %v732
        %v735 = vsel %vm723, 4294967295, %v733
        %736 = vset.pattern.permute.xlu0 0
        %737 = vperm.xlu0 %736, %v734
        %v738 = vpop.permute.xlu0 %737
        %739 = vset.pattern.permute.xlu0 0
        %740 = vperm.xlu0 %739, %v735
        %v741 = vpop.permute.xlu0 %740
        %vm742 = vcmp.eq.s32.totalorder %v420, %v738
        %vm743 = vcmp.eq.s32.totalorder %v420, %v741
        %v744 = vsel %vm742, -inf, %v654
        %v745 = vsel %vm743, -inf, %v655
        %746 = vmax.xlane.f32.xlu0 %v744
        %v747 = vpop.xlane.xlu0 %746
        %748 = vmax.xlane.f32.xlu0 %v745
        %v749 = vpop.xlane.xlu0 %748
        %vm750 = vcmp.eq.f32.partialorder %v744, %v747
        %vm751 = vcmp.eq.f32.partialorder %v745, %v749
        %v752 = vsel %vm750, %v437, 1024
        %v753 = vsel %vm751, %v437, 1024
        %v754 = vand.u32 %v752, 65535
        %v755 = vshra.s32 %v752, 16
        %v756 = vcvt.s32.f32 %v754
        %v757 = vcvt.s32.f32 %v755
        %758 = vmin.xlane.f32.xlu0 %v757
        %v759 = vpop.xlane.xlu0 %758
        %vm760 = vcmp.eq.f32.partialorder %v757, %v759
        %v761 = vsel %vm760, %v756, inf
        %762 = vmin.xlane.f32.xlu0 %v761
        %v763 = vpop.xlane.xlu0 %762
        %v764 = vcvt.f32.s32 %v763
        %v765 = vcvt.f32.s32 %v759
        %v766 = vshll.u32 %v765, 16
        %v767 = vadd.s32 %v766, %v764
        %v768 = vand.u32 %v753, 65535
        %v769 = vshra.s32 %v753, 16
        %v770 = vcvt.s32.f32 %v768
        %v771 = vcvt.s32.f32 %v769
        %772 = vmin.xlane.f32.xlu0 %v771
        %v773 = vpop.xlane.xlu0 %772
        %vm774 = vcmp.eq.f32.partialorder %v771, %v773
        %v775 = vsel %vm774, %v770, inf
        %776 = vmin.xlane.f32.xlu0 %v775
        %v777 = vpop.xlane.xlu0 %776
        %v778 = vcvt.f32.s32 %v777
        %v779 = vcvt.f32.s32 %v773
        %v780 = vshll.u32 %v779, 16
        %v781 = vadd.s32 %v780, %v778
        %v782 = vand.u32 %v767, 7
        %v783 = vand.u32 %v781, 7
        %vm784 = vcmp.eq.s32.totalorder %v730, 1
        %vm785 = vcmp.eq.s32.totalorder %v731, 1
        %v786 = vsel %vm784, %v535, %v424
        %v787 = vsel %vm785, %v537, %v425
        %vm788 = vcmp.eq.s32.totalorder %v730, 2
        %vm789 = vcmp.eq.s32.totalorder %v731, 2
        %v790 = vsel %vm788, %v617, %v786
        %v791 = vsel %vm789, %v619, %v787
        %vm792 = vcmp.eq.s32.totalorder %v730, 3
        %vm793 = vcmp.eq.s32.totalorder %v731, 3
        %v794 = vsel %vm792, %v705, %v790
        %v795 = vsel %vm793, %v707, %v791
        %vm796 = vcmp.eq.s32.totalorder %v730, 4
        %vm797 = vcmp.eq.s32.totalorder %v731, 4
        %798 = vrot.lane.b32.xlu0 %v424, 124
        %v799 = vpop.permute.xlu0 %798
        %800 = vrot.lane.b32.xlu0 %v425, 124
        %v801 = vpop.permute.xlu0 %800
        %v804 = vsel %vm796, %v799, %v794
        %v805 = vsel %vm797, %v801, %v795
        %v806 = vsel %vm784, %v543, %v426
        %v807 = vsel %vm785, %v545, %v427
        %v808 = vsel %vm788, %v627, %v806
        %v809 = vsel %vm789, %v629, %v807
        %v810 = vsel %vm792, %v717, %v808
        %v811 = vsel %vm793, %v719, %v809
        %812 = vrot.lane.b32.xlu0 %v426, 124
        %v813 = vpop.permute.xlu0 %812
        %814 = vrot.lane.b32.xlu0 %v427, 124
        %v815 = vpop.permute.xlu0 %814
        %v816 = vsel %vm796, %v813, %v810
        %v817 = vsel %vm797, %v815, %v811
        %vm818 = vcmp.ge.f32.partialorder %v804, %v747
        %vm819 = vcmp.ge.f32.partialorder %v805, %v749
        %v820 = vmax.f32 %v804, %v747
        %v821 = vmax.f32 %v805, %v749
        %v822 = vsel %vm818, %v816, %v782
        %v823 = vsel %vm819, %v817, %v783
        %p824 = scmp.ne.s32.totalorder %s29, 2
        // Predicated region
        $region49: #{tpu_custom_call.1} parent=35 // pred_check
          %p825 = pneg %p824
        $region50: #{tpu_custom_call.1} parent=35 // pred_check_branch
          %827 = sbr.rel (%p825) target = $region52
        $region51: #{tpu_custom_call.1} parent=35 // pred_region
          %vm828 = vcmask 7168
          %829 = vst.msk [vmem:[#allocation3] sm:$0xff] %vm828, %v472
          %830 = vst.msk [vmem:[#allocation3 + $0x8] sm:$0xff] %vm828, %v473
          %831 = vst.msk [vmem:[#allocation4] sm:$0xff] %vm828, %v474
          %832 = vst.msk [vmem:[#allocation4 + $0x8] sm:$0xff] %vm828, %v475
          %835 = vrot.lane.b32.xlu0 %v550, 1
          %v836 = vpop.permute.xlu0 %835
          %837 = vrot.lane.b32.xlu0 %v551, 1
          %v838 = vpop.permute.xlu0 %837
          %vm841 = vcmask 15368
          %842 = vst.msk [vmem:[#allocation3] sm:$0xff] %vm841, %v836
          %843 = vst.msk [vmem:[#allocation3 + $0x8] sm:$0xff] %vm841, %v838
          %844 = vrot.lane.b32.xlu0 %v552, 1
          %v845 = vpop.permute.xlu0 %844
          %846 = vrot.lane.b32.xlu0 %v553, 1
          %v847 = vpop.permute.xlu0 %846
          %848 = vst.msk [vmem:[#allocation4] sm:$0xff] %vm841, %v845
          %849 = vst.msk [vmem:[#allocation4 + $0x8] sm:$0xff] %vm841, %v847
          %852 = vrot.lane.b32.xlu0 %v634, 2
          %v853 = vpop.permute.xlu0 %852
          %854 = vrot.lane.b32.xlu0 %v635, 2
          %v855 = vpop.permute.xlu0 %854
          %vm858 = vcmask 23568
          %859 = vst.msk [vmem:[#allocation3] sm:$0xff] %vm858, %v853
          %860 = vst.msk [vmem:[#allocation3 + $0x8] sm:$0xff] %vm858, %v855
          %861 = vrot.lane.b32.xlu0 %v636, 2
          %v862 = vpop.permute.xlu0 %861
          %863 = vrot.lane.b32.xlu0 %v637, 2
          %v864 = vpop.permute.xlu0 %863
          %865 = vst.msk [vmem:[#allocation4] sm:$0xff] %vm858, %v862
          %866 = vst.msk [vmem:[#allocation4 + $0x8] sm:$0xff] %vm858, %v864
          %869 = vrot.lane.b32.xlu0 %v724, 3
          %v870 = vpop.permute.xlu0 %869
          %871 = vrot.lane.b32.xlu0 %v725, 3
          %v872 = vpop.permute.xlu0 %871
          %vm875 = vcmask 31768
          %876 = vst.msk [vmem:[#allocation3] sm:$0xff] %vm875, %v870
          %877 = vst.msk [vmem:[#allocation3 + $0x8] sm:$0xff] %vm875, %v872
          %878 = vrot.lane.b32.xlu0 %v726, 3
          %v879 = vpop.permute.xlu0 %878
          %880 = vrot.lane.b32.xlu0 %v727, 3
          %v881 = vpop.permute.xlu0 %880
          %882 = vst.msk [vmem:[#allocation4] sm:$0xff] %vm875, %v879
          %883 = vst.msk [vmem:[#allocation4 + $0x8] sm:$0xff] %vm875, %v881
          %886 = vrot.lane.b32.xlu0 %v820, 4
          %v887 = vpop.permute.xlu0 %886
          %888 = vrot.lane.b32.xlu0 %v821, 4
          %v889 = vpop.permute.xlu0 %888
          %vm892 = vcmask 39968
          %893 = vst.msk [vmem:[#allocation3] sm:$0xff] %vm892, %v887
          %894 = vst.msk [vmem:[#allocation3 + $0x8] sm:$0xff] %vm892, %v889
          %895 = vrot.lane.b32.xlu0 %v822, 4
          %v896 = vpop.permute.xlu0 %895
          %897 = vrot.lane.b32.xlu0 %v823, 4
          %v898 = vpop.permute.xlu0 %897
          %899 = vst.msk [vmem:[#allocation4] sm:$0xff] %vm892, %v896
          %900 = vst.msk [vmem:[#allocation4 + $0x8] sm:$0xff] %vm892, %v898
        $region52: #{tpu_custom_call.1} parent=35 // pred_fallthru
          _
        %p901 = scmp.eq.s32.totalorder %s29, 2
        // Predicated region
        $region53: #{tpu_custom_call.1} parent=35 // pred_check
          %p902 = pneg %p901
        $region54: #{tpu_custom_call.1} parent=35 // pred_check_branch
          %904 = sbr.rel (%p902) target = $region56
        $region55: #{tpu_custom_call.1} parent=35 // pred_region
          %905 = vset.pattern.permute.xlu0 0
          %906 = vperm.xlu0 %905, %v474
          %v907 = vpop.permute.xlu0 %906
          %908 = vset.pattern.permute.xlu0 0
          %909 = vperm.xlu0 %908, %v475
          %v910 = vpop.permute.xlu0 %909
          %vm911 = vcmp.eq.s32.totalorder %v420, %v907
          %vm912 = vcmp.eq.s32.totalorder %v420, %v910
          %v913 = vsel %vm911, 1, 0
          %v914 = vsel %vm912, 1, 0
          %v915 = vcvt.s32.f32 %v913
          %v916 = vcvt.s32.f32 %v914
          %v917 = vsub.f32 %v550, %v472
          %v918 = vsub.f32 %v551, %v473
          %v919 = vmul.f32 %v917, 14.285714
          %v920 = vmul.f32 %v918, 14.285714
          %v921 = vmul.f32 %v919, 1.442695
          %v922 = vpow.pop %v921
          %v923 = vmul.f32 %v920, 1.442695
          %v924 = vpow.pop %v923
          %v925 = vadd.f32 %v922, 1.0
          %v926 = vadd.f32 %v924, 1.0
          %927 = vset.pattern.permute.xlu0 0
          %928 = vperm.xlu0 %927, %v552
          %v929 = vpop.permute.xlu0 %928
          %930 = vset.pattern.permute.xlu0 0
          %931 = vperm.xlu0 %930, %v553
          %v932 = vpop.permute.xlu0 %931
          %vm933 = vcmp.eq.s32.totalorder %v420, %v929
          %vm934 = vcmp.eq.s32.totalorder %v420, %v932
          %v935 = vsel %vm933, 1, 0
          %v936 = vsel %vm934, 1, 0
          %v937 = vcvt.s32.f32 %v935
          %v938 = vcvt.s32.f32 %v936
          %940 = vset.pattern.permute.xlu0 0
          %941 = vperm.xlu0 %940, %v922
          %v942 = vpop.permute.xlu0 %941
          %945 = vset.pattern.permute.xlu0 0
          %946 = vperm.xlu0 %945, %v924
          %v947 = vpop.permute.xlu0 %946
          %v949 = vmul.f32 %v942, %v937
          %v950 = vmul.f32 %v947, %v938
          %v951 = vadd.f32 %v915, %v949
          %v952 = vadd.f32 %v916, %v950
          %v953 = vsub.f32 %v634, %v472
          %v954 = vsub.f32 %v635, %v473
          %v955 = vmul.f32 %v953, 14.285714
          %v956 = vmul.f32 %v954, 14.285714
          %v957 = vmul.f32 %v955, 1.442695
          %v958 = vpow.pop %v957
          %v959 = vmul.f32 %v956, 1.442695
          %v960 = vpow.pop %v959
          %v961 = vadd.f32 %v925, %v958
          %v962 = vadd.f32 %v926, %v960
          %963 = vset.pattern.permute.xlu0 0
          %964 = vperm.xlu0 %963, %v636
          %v965 = vpop.permute.xlu0 %964
          %966 = vset.pattern.permute.xlu0 0
          %967 = vperm.xlu0 %966, %v637
          %v968 = vpop.permute.xlu0 %967
          %vm969 = vcmp.eq.s32.totalorder %v420, %v965
          %vm970 = vcmp.eq.s32.totalorder %v420, %v968
          %v971 = vsel %vm969, 1, 0
          %v972 = vsel %vm970, 1, 0
          %v973 = vcvt.s32.f32 %v971
          %v974 = vcvt.s32.f32 %v972
          %976 = vset.pattern.permute.xlu0 0
          %977 = vperm.xlu0 %976, %v958
          %v978 = vpop.permute.xlu0 %977
          %981 = vset.pattern.permute.xlu0 0
          %982 = vperm.xlu0 %981, %v960
          %v983 = vpop.permute.xlu0 %982
          %v985 = vmul.f32 %v978, %v973
          %v986 = vmul.f32 %v983, %v974
          %v987 = vadd.f32 %v951, %v985
          %v988 = vadd.f32 %v952, %v986
          %v989 = vsub.f32 %v724, %v472
          %v990 = vsub.f32 %v725, %v473
          %v991 = vmul.f32 %v989, 14.285714
          %v992 = vmul.f32 %v990, 14.285714
          %v993 = vmul.f32 %v991, 1.442695
          %v994 = vpow.pop %v993
          %v995 = vmul.f32 %v992, 1.442695
          %v996 = vpow.pop %v995
          %v997 = vadd.f32 %v961, %v994
          %v998 = vadd.f32 %v962, %v996
          %999 = vset.pattern.permute.xlu0 0
          %1000 = vperm.xlu0 %999, %v726
          %v1001 = vpop.permute.xlu0 %1000
          %1002 = vset.pattern.permute.xlu0 0
          %1003 = vperm.xlu0 %1002, %v727
          %v1004 = vpop.permute.xlu0 %1003
          %vm1005 = vcmp.eq.s32.totalorder %v420, %v1001
          %vm1006 = vcmp.eq.s32.totalorder %v420, %v1004
          %v1007 = vsel %vm1005, 1, 0
          %v1008 = vsel %vm1006, 1, 0
          %v1009 = vcvt.s32.f32 %v1007
          %v1010 = vcvt.s32.f32 %v1008
          %1012 = vset.pattern.permute.xlu0 0
          %1013 = vperm.xlu0 %1012, %v994
          %v1014 = vpop.permute.xlu0 %1013
          %1017 = vset.pattern.permute.xlu0 0
          %1018 = vperm.xlu0 %1017, %v996
          %v1019 = vpop.permute.xlu0 %1018
          %v1021 = vmul.f32 %v1014, %v1009
          %v1022 = vmul.f32 %v1019, %v1010
          %v1023 = vadd.f32 %v987, %v1021
          %v1024 = vadd.f32 %v988, %v1022
          %v1025 = vsub.f32 %v820, %v472
          %v1026 = vsub.f32 %v821, %v473
          %v1027 = vmul.f32 %v1025, 14.285714
          %v1028 = vmul.f32 %v1026, 14.285714
          %v1029 = vmul.f32 %v1027, 1.442695
          %v1030 = vpow.pop %v1029
          %v1031 = vmul.f32 %v1028, 1.442695
          %v1032 = vpow.pop %v1031
          %v1033 = vadd.f32 %v997, %v1030
          %v1034 = vadd.f32 %v998, %v1032
          %1035 = vset.pattern.permute.xlu0 0
          %1036 = vperm.xlu0 %1035, %v822
          %v1037 = vpop.permute.xlu0 %1036
          %1038 = vset.pattern.permute.xlu0 0
          %1039 = vperm.xlu0 %1038, %v823
          %v1040 = vpop.permute.xlu0 %1039
          %vm1041 = vcmp.eq.s32.totalorder %v420, %v1037
          %vm1042 = vcmp.eq.s32.totalorder %v420, %v1040
          %v1043 = vsel %vm1041, 1, 0
          %v1044 = vsel %vm1042, 1, 0
          %v1045 = vcvt.s32.f32 %v1043
          %v1046 = vcvt.s32.f32 %v1044
          %1048 = vset.pattern.permute.xlu0 0
          %1049 = vperm.xlu0 %1048, %v1030
          %v1050 = vpop.permute.xlu0 %1049
          %1053 = vset.pattern.permute.xlu0 0
          %1054 = vperm.xlu0 %1053, %v1032
          %v1055 = vpop.permute.xlu0 %1054
          %v1057 = vmul.f32 %v1050, %v1045
          %v1058 = vmul.f32 %v1055, %v1046
          %v1059 = vadd.f32 %v1023, %v1057
          %v1060 = vadd.f32 %v1024, %v1058
          %v1061 = vrcp.pop %v1033
          %v1062 = vrcp.pop %v1034
          %1064 = vset.pattern.permute.xlu0 0
          %1065 = vperm.xlu0 %1064, %v1061
          %v1066 = vpop.permute.xlu0 %1065
          %1069 = vset.pattern.permute.xlu0 0
          %1070 = vperm.xlu0 %1069, %v1062
          %v1071 = vpop.permute.xlu0 %1070
          %v1073 = vmul.f32 %v1059, %v1066
          %v1074 = vmul.f32 %v1060, %v1071
          %v1075 = vadd.f32 %v1073, 1e-05
          %v1076 = vadd.f32 %v1074, 1e-05
          %v1077 = vmin.f32 %v1075, 1.0
          %v1078 = vmin.f32 %v1076, 1.0
          %1079 = vst [vmem:[%s288] sm:$0xff] %v1077
          %1080 = vst [vmem:[%s288 + $0x8] sm:$0xff] %v1078
        $region56: #{tpu_custom_call.1} parent=35 // pred_fallthru
          _
        %s1081 = sand.u32 %s148, 1
        %s1082 = scalar_lea.sflag [#allocation7], %s1081
        %s1083 = sand.u32 %s148, 1
        %s1084 = smul.addr %s1083, 16
        %s1085 = scalar_lea.vmem [#allocation10], %s1084
        // Predicated region
        $region57: #{tpu_custom_call.1} parent=35 // pred_check
          %p1086 = pneg %p158
        $region58: #{tpu_custom_call.1} parent=35 // pred_check_branch
          %1088 = sbr.rel (%p1086) target = $region60
        $region59: #{tpu_custom_call.1} parent=35 // pred_region
          %s1089 = smul.u32 2, %s28
          %s1091 = ssub.s32 256, 256
          %1092 = vsyncadd %s1082, %s1091
          %s1093 = smul.addr %s1089, 128
          %s1094 = scalar_lea.hbm %s4, %s1093
          %s1095 = sshll.u32 %s1085, 4
          %s1096 = int_to_ptr.vmem [resolvable:$true] %s1095
          %1101 = dma.vmem_to_hbm [thread:$0]  %s1096, 256, %s1094, %s1082, 128, 128, 8
        $region60: #{tpu_custom_call.1} parent=35 // pred_fallthru
          _
      $region36: #{tpu_custom_call.1} parent=5 // pred_fallthru
        _
      %p1102 = scmp.le.s32.totalorder 2, %s19
      // Predicated region
      $region61: #{tpu_custom_call.1} parent=5 // pred_check
        %p1103 = pneg %p1102
      $region62: #{tpu_custom_call.1} parent=5 // pred_check_branch
        %1105 = sbr.rel (%p1103) target = $region64
      $region63: #{tpu_custom_call.1} parent=5 // pred_region
        %s1106 = ssub.s32 %s19, 2
        // Predicated region
        $region65: #{tpu_custom_call.1} parent=63 // pred_check
          %p1107 = pneg %p164
        $region66: #{tpu_custom_call.1} parent=63 // pred_check_branch
          %1109 = sbr.rel (%p1107) target = $region68
        $region67: #{tpu_custom_call.1} parent=63 // pred_region
          %s1110 = sand.u32 %s149, 1
          %s1111 = scalar_lea.sflag [#allocation7], %s1110
          %s1112 = sand.u32 %s149, 1
          %s1113 = smul.addr %s1112, 16
          %s1114 = scalar_lea.vmem [#allocation10], %s1113
          %1115 = dma.done %s1111, 256
        $region68: #{tpu_custom_call.1} parent=63 // pred_fallthru
          _
      $region64: #{tpu_custom_call.1} parent=5 // pred_fallthru
        _
    $region6: #{tpu_custom_call.1} parent=1 // loop_footer
      %s23 = sadd.s32 1, %s19
    $region7: #{tpu_custom_call.1} parent=1 // loop_footer_branch
      %18 = sbr.rel target = $region3
    $region8: #{tpu_custom_call.1} parent=1 // loop_exit
      _
    %1116 = vsyncpa [#allocation6], 1
    %s1117 = scalar_lea.sflag [#allocation6], 1
    %1118 = vsyncpa %s1117, 1
    %1119 = vsyncpa [#allocation9], 1
    %s1120 = scalar_lea.sflag [#allocation9], 1
    %1121 = vsyncpa %s1120, 1
    %1122 = vsyncpa [#allocation7], 1
    %s1123 = scalar_lea.sflag [#allocation7], 1
    %1124 = vsyncpa %s1123, 1

</llo_original>
